<compile_context>
chip_gen: v7x
topology: tpu7x:2x2x1
jax: 0.10.0
libtpu: 0.0.40
codegen_flags: <defaults>
</compile_context>

<pallas_src>
import functools

import jax
import jax.numpy as jnp
import numpy as np
from jax import lax
from jax.experimental import pallas as pl
from jax.experimental.pallas import tpu as pltpu


def _round_up(x, m):
    return ((x + m - 1) // m) * m


# ----------------------------------------------------------------------------
# Kernel 1: dense layer   out = x @ w + b   (lane-dense, M-blocked MXU matmul)
# Used for the hoisted GRU input projection GX = x @ W_ih + b_ih.
# ----------------------------------------------------------------------------
def _dense_kernel(x_ref, w_ref, b_ref, o_ref):
    acc = jnp.dot(x_ref[...], w_ref[...], preferred_element_type=jnp.float32)
    o_ref[...] = (acc + b_ref[...]).astype(o_ref.dtype)


def _pick_block_m(m_rows):
    # Largest row block that divides M (single block for small M) so there is
    # no partially-valid last block; >= 2 blocks at production sizes gives the
    # "parallel" axis something to split across v7x's TensorCores.
    if m_rows <= 1024:
        return m_rows
    for bm in (1024, 512, 256, 128, 64, 32, 16, 8):
        if m_rows % bm == 0:
            return bm
    return m_rows


def _dense(x2d, w, b, *, out_dtype):
    M, K = x2d.shape
    N = w.shape[1]
    block_m = _pick_block_m(M)
    return pl.pallas_call(
        _dense_kernel,
        out_shape=jax.ShapeDtypeStruct((M, N), out_dtype),
        grid_spec=pltpu.PrefetchScalarGridSpec(
            num_scalar_prefetch=0,
            grid=(M // block_m,),
            in_specs=[
                pl.BlockSpec((block_m, K), lambda m: (m, 0)),
                pl.BlockSpec((K, N), lambda m: (0, 0)),
                pl.BlockSpec((1, N), lambda m: (0, 0)),
            ],
            out_specs=pl.BlockSpec((block_m, N), lambda m: (m, 0)),
        ),
        compiler_params=pltpu.CompilerParams(
            dimension_semantics=("parallel",)),
    )(x2d, w, b)


# ----------------------------------------------------------------------------
# Kernel 2: GRU recurrence fused with the final Linear.
# Grid = (batch_blocks [parallel], T_chunks [arbitrary]).  h lives in VMEM
# scratch and carries across T-chunks; GX / out are streamed per chunk.
#
# Refs (scalar-prefetch first, then inputs, outputs, scratch):
#   blk_maxlen_ref : (nblk_b,)           int32  SMEM  per-block max length
#   lengths_ref    : (bb, 1)             int32         per-row lengths
#   gx_ref         : (T_chunk, bb, 3H)   cdt           x@W_ih + b_ih  [r|z|n]
#   w_hh_ref       : (H, 3H)             cdt
#   b_hh_ref       : (1, 3H)             f32
#   w_lin_ref      : (H, Opad)           cdt    zero-padded to 128 lanes
#   b_lin_ref      : (1, Opad)           f32    zero-padded to 128 lanes
#   out_ref        : (T_chunk, bb, Opad) f32    lane-dense output block
#   h_ref          : (bb, H)             f32    scratch: running hidden state
# ----------------------------------------------------------------------------
def _gru_linear_kernel(blk_maxlen_ref, lengths_ref, gx_ref, w_hh_ref, b_hh_ref,
                       w_lin_ref, b_lin_ref, out_ref, h_ref):
    b = pl.program_id(0)
    tc = pl.program_id(1)
    t_chunk = gx_ref.shape[0]
    H = w_hh_ref.shape[0]

    @pl.when(tc == 0)
    def _():
        h_ref[...] = jnp.zeros_like(h_ref)

    t0 = tc * t_chunk
    blk_len = blk_maxlen_ref[b]

    # Loop-invariant reads hoisted out of the serial time loop.
    w_hh = w_hh_ref[...]
    b_hh = b_hh_ref[...]
    w_lin = w_lin_ref[...]
    b_lin = b_lin_ref[...]
    lengths = lengths_ref[...]                       # (bb, 1) int32
    cdt = w_hh.dtype                                 # matmul compute dtype

    @pl.when(t0 < blk_len)
    def _live_chunk():
        def step(i, carry):
            t = t0 + i
            h_prev = h_ref[...]                      # (bb, H) f32
            gx = gx_ref[i].astype(jnp.float32)       # (bb, 3H)
            gh = (jnp.dot(h_prev.astype(cdt), w_hh,
                          preferred_element_type=jnp.float32)
                  + b_hh)                            # single fused 3-gate matmul
            r = jax.nn.sigmoid(gx[:, 0:H] + gh[:, 0:H])
            z = jax.nn.sigmoid(gx[:, H:2 * H] + gh[:, H:2 * H])
            n = jnp.tanh(gx[:, 2 * H:] + r * gh[:, 2 * H:])
            h_new = (1.0 - z) * n + z * h_prev

            # Packing semantics: only rows still alive at step t update / emit.
            alive = t < lengths                      # (bb, 1) bool
            h_ref[...] = jnp.where(alive, h_new, h_prev)
            h_emit = jnp.where(alive, h_new, 0.0)    # (bb, H)

            # Fused Linear: lane-dense (bb, Opad) store; padded rows = bias.
            out_ref[i] = (jnp.dot(h_emit.astype(cdt), w_lin,
                                  preferred_element_type=jnp.float32)
                          + b_lin).astype(out_ref.dtype)
            return carry

        lax.fori_loop(0, t_chunk, step, 0, unroll=4)

    @pl.when(t0 >= blk_len)
    def _dead_chunk():
        # Every row of this batch block is past its length for this whole
        # chunk: pad_packed_sequence emits zeros -> Linear(0) = bias.
        out_ref[...] = jnp.broadcast_to(b_lin, out_ref.shape).astype(out_ref.dtype)


def _gru_linear(blk_maxlen, lengths2d, gx, w_hh, b_hh, w_lin_p, b_lin_p,
                *, batch_block, t_chunk):
    t_pad, B, H3 = gx.shape
    H = w_hh.shape[0]
    Opad = w_lin_p.shape[1]
    nblk_b = B // batch_block
    n_tc = t_pad // t_chunk

    grid_spec = pltpu.PrefetchScalarGridSpec(
        num_scalar_prefetch=1,
        grid=(nblk_b, n_tc),
        in_specs=[
            pl.BlockSpec((batch_block, 1), lambda b, tc, ml: (b, 0)),
            pl.BlockSpec((t_chunk, batch_block, H3), lambda b, tc, ml: (tc, b, 0)),
            pl.BlockSpec((H, H3), lambda b, tc, ml: (0, 0)),
            pl.BlockSpec((1, H3), lambda b, tc, ml: (0, 0)),
            pl.BlockSpec((H, Opad), lambda b, tc, ml: (0, 0)),
            pl.BlockSpec((1, Opad), lambda b, tc, ml: (0, 0)),
        ],
        out_specs=pl.BlockSpec((t_chunk, batch_block, Opad),
                               lambda b, tc, ml: (tc, b, 0)),
        scratch_shapes=[pltpu.VMEM((batch_block, H), jnp.float32)],
    )
    return pl.pallas_call(
        _gru_linear_kernel,
        out_shape=jax.ShapeDtypeStruct((t_pad, B, Opad), jnp.float32),
        grid_spec=grid_spec,
        compiler_params=pltpu.CompilerParams(
            dimension_semantics=("parallel", "arbitrary"),
            # Explicit budget (under v7x's 64 MiB/TC) instead of scoped default.
            vmem_limit_bytes=48 * 1024 * 1024),
    )(blk_maxlen, lengths2d, gx, w_hh, b_hh, w_lin_p, b_lin_p)


# ----------------------------------------------------------------------------
# Encoder forward = input projection (dense) -> fused recurrence + Linear.
# ----------------------------------------------------------------------------
@functools.partial(
    jax.jit, static_argnames=("t_out", "t_chunk", "batch_block", "compute_dtype"))
def _encoder_impl(inp, lengths, params, *, t_out, t_chunk=32, batch_block=None,
                  compute_dtype=jnp.bfloat16):
    T, B, I = inp.shape
    H3 = params["w_ih"].shape[1]
    H = H3 // 3
    O = params["w_lin"].shape[1]
    Opad = _round_up(max(O, 128), 128)        # lane-dense output stores
    cdt = compute_dtype

    # Batch split only when legal + useful (v7x megacore); otherwise one block.
    if (batch_block is None or batch_block >= B or B < 16
            or B % batch_block != 0 or batch_block % 8 != 0):
        batch_block = B
    nblk_b = B // batch_block

    # T-chunking for pipelined GX streaming / bounded VMEM.
    t_chunk = max(1, min(int(t_chunk), _round_up(t_out, 8)))
    t_pad = _round_up(t_out, t_chunk)

    lengths = lengths.astype(jnp.int32)
    lengths2d = lengths.reshape(B, 1)
    blk_maxlen = jnp.max(lengths.reshape(nblk_b, batch_block), axis=1)

    # Hoisted input projection: one lane-dense matmul for all timesteps.
    x = inp[:t_out].astype(cdt)
    if t_pad > t_out:
        x = jnp.concatenate([x, jnp.zeros((t_pad - t_out, B, I), cdt)], axis=0)
    gx = _dense(x.reshape(t_pad * B, I),
                params["w_ih"].astype(cdt), params["b_ih"],
                out_dtype=cdt).reshape(t_pad, B, H3)

    # Pad the Linear to 128 output lanes; padded columns are zero.
    w_lin_p = jnp.zeros((H, Opad), cdt).at[:, :O].set(params["w_lin"].astype(cdt))
    b_lin_p = jnp.zeros((1, Opad), jnp.float32).at[:, :O].set(params["b_lin"])

    out_p = _gru_linear(blk_maxlen, lengths2d, gx,
                        params["w_hh"].astype(cdt), params["b_hh"],
                        w_lin_p, b_lin_p,
                        batch_block=batch_block, t_chunk=t_chunk)
    return out_p[:t_out, :, :O]


def encoder_forward(inp, lengths, params, *, max_len=None, t_chunk=32,
                    batch_block=None, compute_dtype=jnp.bfloat16):
    """inp: [T, B, I] f32, lengths: [B] int. Returns [max_len, B, O] f32.

    Pass `max_len` (= int(max(lengths))) explicitly when calling under jit to
    avoid a host sync; if None it is computed on the host here.
    """
    if max_len is None:
        max_len = int(np.max(np.asarray(lengths)))
    return _encoder_impl(inp, lengths, params, t_out=int(max_len),
                         t_chunk=t_chunk, batch_block=batch_block,
                         compute_dtype=compute_dtype)


# ----------------------------------------------------------------------------
# Parameters (PyTorch nn.GRU / nn.Linear layout, reshaped matmul-ready).
# ----------------------------------------------------------------------------
def make_params(key, input_size, hidden_size, output_size):
    ks = jax.random.split(key, 6)
    kg = 1.0 / np.sqrt(hidden_size)

    # PyTorch layout: weight_ih_l0 (3H, I), weight_hh_l0 (3H, H), biases (3H,)
    w_ih_pt = jax.random.uniform(ks[0], (3 * hidden_size, input_size), jnp.float32, -kg, kg)
    w_hh_pt = jax.random.uniform(ks[1], (3 * hidden_size, hidden_size), jnp.float32, -kg, kg)
    b_ih_pt = jax.random.uniform(ks[2], (3 * hidden_size,), jnp.float32, -kg, kg)
    b_hh_pt = jax.random.uniform(ks[3], (3 * hidden_size,), jnp.float32, -kg, kg)

    kl = 1.0 / np.sqrt(hidden_size)
    w_lin_pt = jax.random.uniform(ks[4], (output_size, hidden_size), jnp.float32, -kl, kl)
    b_lin_pt = jax.random.uniform(ks[5], (output_size,), jnp.float32, -kl, kl)

    return {
        "w_ih": w_ih_pt.T,                              # (I, 3H), gates [r|z|n]
        "w_hh": w_hh_pt.T,                              # (H, 3H)
        "b_ih": b_ih_pt.reshape(1, 3 * hidden_size),    # (1, 3H)
        "b_hh": b_hh_pt.reshape(1, 3 * hidden_size),    # (1, 3H)
        "w_lin": w_lin_pt.T,                            # (H, O)
        "b_lin": b_lin_pt.reshape(1, output_size),      # (1, O)
    }


# ----------------------------------------------------------------------------
# Pure-JAX reference (packed-GRU + Linear semantics), mirroring the kernel's
# matmul-boundary compute dtype so both paths can be checked tightly.
# ----------------------------------------------------------------------------
def reference_encoder(inp, lengths, params, max_len, compute_dtype=jnp.float32):
    T, B, I = inp.shape
    H = params["w_hh"].shape[0]
    cdt = compute_dtype
    lengths = lengths.astype(jnp.int32)

    x = inp[:max_len].astype(cdt)
    gx_all = (jnp.einsum("tbi,ih->tbh", x, params["w_ih"].astype(cdt),
                         preferred_element_type=jnp.float32)
              + params["b_ih"]).astype(cdt)
    w_hh = params["w_hh"].astype(cdt)
    w_lin = params["w_lin"].astype(cdt)

    def step(h, inputs):
        gx, t = inputs
        gx = gx.astype(jnp.float32)
        gh = (jnp.dot(h.astype(cdt), w_hh, preferred_element_type=jnp.float32)
              + params["b_hh"])
        r = jax.nn.sigmoid(gx[:, 0:H] + gh[:, 0:H])
        z = jax.nn.sigmoid(gx[:, H:2 * H] + gh[:, H:2 * H])
        n = jnp.tanh(gx[:, 2 * H:] + r * gh[:, 2 * H:])
        h_new = (1.0 - z) * n + z * h
        mask = (t < lengths)[:, None]
        return jnp.where(mask, h_new, h), jnp.where(mask, h_new, 0.0)

    h0 = jnp.zeros((B, H), jnp.float32)
    ts = jnp.arange(max_len, dtype=jnp.int32)
    _, hseq = lax.scan(step, h0, (gx_all, ts))
    return (jnp.einsum("tbh,ho->tbo", hseq.astype(cdt), w_lin,
                       preferred_element_type=jnp.float32)
            + params["b_lin"])


if __name__ == "__main__":
    T, B = 12, 4
    input_size, hidden_size, output_size = 16, 128, 8

    key = jax.random.PRNGKey(0)
    k_inp, k_par = jax.random.split(key)

    inp = jax.random.normal(k_inp, (T, B, input_size), jnp.float32)
    lengths = jnp.array([10, 7, 3, 10], dtype=jnp.int32)   # variable-length batch
    max_len = 10                                            # static max(lengths)

    params = make_params(k_par, input_size, hidden_size, output_size)

    # (1) f32 path: tight check of the PyTorch packed-GRU + Linear semantics.
    # t_chunk=4 so the demo actually exercises multiple T-chunks / h carry.
    out_f32 = encoder_forward(inp, lengths, params, max_len=max_len,
                              t_chunk=4, compute_dtype=jnp.float32)
    out_f32 = jax.block_until_ready(out_f32)
    ref_f32 = reference_encoder(inp, lengths, params, max_len, jnp.float32)
    np.testing.assert_allclose(np.asarray(out_f32), np.asarray(ref_f32),
                               rtol=1e-4, atol=1e-4)

    # (2) bf16-matmul-boundary perf path (production default), checked against
    # a reference that mirrors the same casts.
    out_bf = encoder_forward(inp, lengths, params, max_len=max_len,
                             t_chunk=4, compute_dtype=jnp.bfloat16)
    out_bf = jax.block_until_ready(out_bf)
    ref_bf = reference_encoder(inp, lengths, params, max_len, jnp.bfloat16)
    np.testing.assert_allclose(np.asarray(out_bf), np.asarray(ref_bf),
                               rtol=2e-2, atol=2e-2)

    print("KERNEL_OK")
</pallas_src>

<mosaic_0001>
module attributes {stable_mosaic.version = 11 : i64} {
  func.func @_dense_kernel(%arg0: i32, %arg1: memref<48x16xf32, #tpu.memory_space<vmem>>, %arg2: memref<16x384xf32, #tpu.memory_space<vmem>>, %arg3: memref<1x384xf32, #tpu.memory_space<vmem>>, %arg4: memref<48x384xf32, #tpu.memory_space<vmem>>) attributes {dimension_semantics = [#tpu.dimension_semantics<parallel>], iteration_bounds = array<i64: 1>, scalar_prefetch = 0 : i64, scratch_operands = 0 : i64, tpu.core_type = #tpu.core_type<tc>, window_params = [{transform_indices = @transform_0, window_bounds = array<i64: 48, 16>}, {pipeline_mode = #tpu.pipeline_mode<synchronous>, transform_indices = @transform_1, window_bounds = array<i64: 16, 384>}, {pipeline_mode = #tpu.pipeline_mode<synchronous>, transform_indices = @transform_2, window_bounds = array<i64: 1, 384>}, {transform_indices = @transform_3, window_bounds = array<i64: 48, 384>}]} {
    %c0 = arith.constant 0 : index
    %c0_0 = arith.constant 0 : index
    %0 = vector.load %arg1[%c0, %c0_0] : memref<48x16xf32, #tpu.memory_space<vmem>>, vector<48x16xf32>
    %c0_1 = arith.constant 0 : index
    %c0_2 = arith.constant 0 : index
    %1 = vector.load %arg2[%c0_1, %c0_2] : memref<16x384xf32, #tpu.memory_space<vmem>>, vector<16x384xf32>
    %cst = arith.constant dense<0.000000e+00> : vector<48x384xf32>
    %2 = tpu.matmul %0, %1, %cst {dimension_numbers = #tpu.dot_dimension_numbers<[1], [0], [0], [1], [0, 0, 1, 1], [], []>} : vector<48x16xf32>, vector<16x384xf32>, vector<48x384xf32> -> vector<48x384xf32>
    %c0_3 = arith.constant 0 : index
    %c0_4 = arith.constant 0 : index
    %3 = vector.load %arg3[%c0_3, %c0_4] : memref<1x384xf32, #tpu.memory_space<vmem>>, vector<1x384xf32>
    %4 = vector.broadcast %3 : vector<1x384xf32> to vector<48x384xf32>
    %5 = arith.addf %2, %4 : vector<48x384xf32>
    %c0_5 = arith.constant 0 : index
    %c0_6 = arith.constant 0 : index
    %6 = vector.load %arg4[%c0_5, %c0_6] : memref<48x384xf32, #tpu.memory_space<vmem>>, vector<48x384xf32>
    tpu.vector_store %arg4[%c0_5, %c0_6], %5 {strides = array<i32>} : memref<48x384xf32, #tpu.memory_space<vmem>>, vector<48x384xf32>,
    return
  }
  func.func @transform_0(%arg0: i32) -> (i32, i32) {
    %c0_i32 = arith.constant 0 : i32
    %c0_i32_0 = arith.constant 0 : i32
    return %arg0, %c0_i32 : i32, i32
  }
  func.func @transform_1(%arg0: i32) -> (i32, i32) {
    %c0_i32 = arith.constant 0 : i32
    %c0_i32_0 = arith.constant 0 : i32
    %c0_i32_1 = arith.constant 0 : i32
    return %c0_i32, %c0_i32_0 : i32, i32
  }
  func.func @transform_2(%arg0: i32) -> (i32, i32) {
    %c0_i32 = arith.constant 0 : i32
    %c0_i32_0 = arith.constant 0 : i32
    %c0_i32_1 = arith.constant 0 : i32
    return %c0_i32, %c0_i32_0 : i32, i32
  }
  func.func @transform_3(%arg0: i32) -> (i32, i32) {
    %c0_i32 = arith.constant 0 : i32
    %c0_i32_0 = arith.constant 0 : i32
    return %arg0, %c0_i32 : i32, i32
  }
}

module attributes {stable_mosaic.version = 11 : i64} {
  func.func @_gru_linear_kernel(%arg0: i32, %arg1: i32, %arg2: memref<1xi32, #tpu.memory_space<smem>>, %arg3: memref<4x1xi32, #tpu.memory_space<vmem>>, %arg4: memref<4x4x384xf32, #tpu.memory_space<vmem>>, %arg5: memref<128x384xf32, #tpu.memory_space<vmem>>, %arg6: memref<1x384xf32, #tpu.memory_space<vmem>>, %arg7: memref<128x128xf32, #tpu.memory_space<vmem>>, %arg8: memref<1x128xf32, #tpu.memory_space<vmem>>, %arg9: memref<4x4x128xf32, #tpu.memory_space<vmem>>, %arg10: memref<4x128xf32, #tpu.memory_space<vmem>>) attributes {dimension_semantics = [#tpu.dimension_semantics<parallel>, #tpu.dimension_semantics<arbitrary>], iteration_bounds = array<i64: 1, 3>, scalar_prefetch = 1 : i64, scratch_operands = 1 : i64, tpu.core_type = #tpu.core_type<tc>, window_params = [{transform_indices = @transform_0, window_bounds = array<i64: 4, 1>}, {transform_indices = @transform_1, window_bounds = array<i64: 4, 4, 384>}, {pipeline_mode = #tpu.pipeline_mode<synchronous>, transform_indices = @transform_2, window_bounds = array<i64: 128, 384>}, {pipeline_mode = #tpu.pipeline_mode<synchronous>, transform_indices = @transform_3, window_bounds = array<i64: 1, 384>}, {pipeline_mode = #tpu.pipeline_mode<synchronous>, transform_indices = @transform_4, window_bounds = array<i64: 128, 128>}, {pipeline_mode = #tpu.pipeline_mode<synchronous>, transform_indices = @transform_5, window_bounds = array<i64: 1, 128>}, {transform_indices = @transform_6, window_bounds = array<i64: 4, 4, 128>}]} {
    %c0_i32 = arith.constant 0 : i32
    %0 = arith.cmpi eq, %arg1, %c0_i32 : i32
    %1 = arith.extui %0 : i1 to i32
    %c0_i32_0 = arith.constant 0 : i32
    %2 = arith.cmpi ne, %1, %c0_i32_0 : i32
    scf.if %2 {
      %cst = arith.constant 0.000000e+00 : f32
      %17 = vector.broadcast %cst : f32 to vector<4x128xf32>
      %c0_12 = arith.constant 0 : index
      %c0_13 = arith.constant 0 : index
      %18 = vector.load %arg10[%c0_12, %c0_13] : memref<4x128xf32, #tpu.memory_space<vmem>>, vector<4x128xf32>
      tpu.vector_store %arg10[%c0_12, %c0_13], %17 {strides = array<i32>} : memref<4x128xf32, #tpu.memory_space<vmem>>, vector<4x128xf32>,
    } else {
    }
    %c4_i32 = arith.constant 4 : i32
    %3 = arith.muli %arg1, %c4_i32 : i32
    %4 = arith.index_cast %arg0 : i32 to index
    %5 = memref.load %arg2[%4] : memref<1xi32, #tpu.memory_space<smem>>
    %c0 = arith.constant 0 : index
    %c0_1 = arith.constant 0 : index
    %6 = vector.load %arg5[%c0, %c0_1] : memref<128x384xf32, #tpu.memory_space<vmem>>, vector<128x384xf32>
    %c0_2 = arith.constant 0 : index
    %c0_3 = arith.constant 0 : index
    %7 = vector.load %arg6[%c0_2, %c0_3] : memref<1x384xf32, #tpu.memory_space<vmem>>, vector<1x384xf32>
    %c0_4 = arith.constant 0 : index
    %c0_5 = arith.constant 0 : index
    %8 = vector.load %arg7[%c0_4, %c0_5] : memref<128x128xf32, #tpu.memory_space<vmem>>, vector<128x128xf32>
    %c0_6 = arith.constant 0 : index
    %c0_7 = arith.constant 0 : index
    %9 = vector.load %arg8[%c0_6, %c0_7] : memref<1x128xf32, #tpu.memory_space<vmem>>, vector<1x128xf32>
    %c0_8 = arith.constant 0 : index
    %c0_9 = arith.constant 0 : index
    %10 = vector.load %arg3[%c0_8, %c0_9] : memref<4x1xi32, #tpu.memory_space<vmem>>, vector<4x1xi32>
    %11 = arith.cmpi slt, %3, %5 : i32
    %12 = arith.extui %11 : i1 to i32
    %c0_i32_10 = arith.constant 0 : i32
    %13 = arith.cmpi ne, %12, %c0_i32_10 : i32
    scf.if %13 {
      %c0_i32_12 = arith.constant 0 : i32
      %17 = arith.addi %3, %c0_i32_12 : i32
      %c0_13 = arith.constant 0 : index
      %c0_14 = arith.constant 0 : index
      %18 = vector.load %arg10[%c0_13, %c0_14] : memref<4x128xf32, #tpu.memory_space<vmem>>, vector<4x128xf32>
      %19 = arith.index_cast %c0_i32_12 : i32 to index
      %c0_15 = arith.constant 0 : index
      %c0_16 = arith.constant 0 : index
      %20 = vector.load %arg4[%19, %c0_15, %c0_16] : memref<4x4x384xf32, #tpu.memory_space<vmem>>, vector<1x4x384xf32>
      %21 = vector.shape_cast %20 : vector<1x4x384xf32> to vector<4x384xf32>
      %cst = arith.constant dense<0.000000e+00> : vector<4x384xf32>
      %22 = tpu.matmul %18, %6, %cst {dimension_numbers = #tpu.dot_dimension_numbers<[1], [0], [0], [1], [0, 0, 1, 1], [], []>} : vector<4x128xf32>, vector<128x384xf32>, vector<4x384xf32> -> vector<4x384xf32>
      %23 = vector.broadcast %7 : vector<1x384xf32> to vector<4x384xf32>
      %24 = arith.addf %22, %23 : vector<4x384xf32>
      %25 = vector.extract_strided_slice %21 {offsets = [0, 0], sizes = [4, 128], strides = [1, 1]} : vector<4x384xf32> to vector<4x128xf32>
      %26 = vector.extract_strided_slice %24 {offsets = [0, 0], sizes = [4, 128], strides = [1, 1]} : vector<4x384xf32> to vector<4x128xf32>
      %27 = arith.addf %25, %26 : vector<4x128xf32>
      %28 = arith.negf %27 : vector<4x128xf32>
      %29 = math.exp %28 : vector<4x128xf32>
      %cst_17 = arith.constant 1.000000e+00 : f32
      %30 = vector.broadcast %cst_17 : f32 to vector<4x128xf32>
      %31 = arith.addf %30, %29 : vector<4x128xf32>
      %32 = arith.divf %30, %31 : vector<4x128xf32>
      %33 = vector.extract_strided_slice %21 {offsets = [0, 128], sizes = [4, 128], strides = [1, 1]} : vector<4x384xf32> to vector<4x128xf32>
      %34 = vector.extract_strided_slice %24 {offsets = [0, 128], sizes = [4, 128], strides = [1, 1]} : vector<4x384xf32> to vector<4x128xf32>
      %35 = arith.addf %33, %34 : vector<4x128xf32>
      %36 = arith.negf %35 : vector<4x128xf32>
      %37 = math.exp %36 : vector<4x128xf32>
      %cst_18 = arith.constant 1.000000e+00 : f32
      %38 = vector.broadcast %cst_18 : f32 to vector<4x128xf32>
      %39 = arith.addf %38, %37 : vector<4x128xf32>
      %40 = arith.divf %38, %39 : vector<4x128xf32>
      %41 = vector.extract_strided_slice %21 {offsets = [0, 256], sizes = [4, 128], strides = [1, 1]} : vector<4x384xf32> to vector<4x128xf32>
      %42 = vector.extract_strided_slice %24 {offsets = [0, 256], sizes = [4, 128], strides = [1, 1]} : vector<4x384xf32> to vector<4x128xf32>
      %43 = arith.mulf %32, %42 : vector<4x128xf32>
      %44 = arith.addf %41, %43 : vector<4x128xf32>
      %45 = math.tanh %44 : vector<4x128xf32>
      %cst_19 = arith.constant 1.000000e+00 : f32
      %46 = vector.broadcast %cst_19 : f32 to vector<4x128xf32>
      %47 = arith.subf %46, %40 : vector<4x128xf32>
      %48 = arith.mulf %47, %45 : vector<4x128xf32>
      %49 = arith.mulf %40, %18 : vector<4x128xf32>
      %50 = arith.addf %48, %49 : vector<4x128xf32>
      %51 = vector.broadcast %17 : i32 to vector<4x1xi32>
      %52 = arith.cmpi slt, %51, %10 : vector<4x1xi32>
      %53 = vector.shape_cast %52 : vector<4x1xi1> to vector<4x1xi1>
      %54 = vector.broadcast %53 : vector<4x1xi1> to vector<4x128xi1>
      %55 = arith.select %54, %50, %18 : vector<4x128xi1>, vector<4x128xf32>
      %c0_20 = arith.constant 0 : index
      %c0_21 = arith.constant 0 : index
      %56 = vector.load %arg10[%c0_20, %c0_21] : memref<4x128xf32, #tpu.memory_space<vmem>>, vector<4x128xf32>
      tpu.vector_store %arg10[%c0_20, %c0_21], %55 {strides = array<i32>} : memref<4x128xf32, #tpu.memory_space<vmem>>, vector<4x128xf32>,
      %cst_22 = arith.constant 0.000000e+00 : f32
      %57 = vector.shape_cast %52 : vector<4x1xi1> to vector<4x1xi1>
      %58 = vector.broadcast %57 : vector<4x1xi1> to vector<4x128xi1>
      %59 = vector.broadcast %cst_22 : f32 to vector<4x128xf32>
      %60 = arith.select %58, %50, %59 : vector<4x128xi1>, vector<4x128xf32>
      %cst_23 = arith.constant dense<0.000000e+00> : vector<4x128xf32>
      %61 = tpu.matmul %60, %8, %cst_23 {dimension_numbers = #tpu.dot_dimension_numbers<[1], [0], [0], [1], [0, 0, 1, 1], [], []>} : vector<4x128xf32>, vector<128x128xf32>, vector<4x128xf32> -> vector<4x128xf32>
      %62 = vector.broadcast %9 : vector<1x128xf32> to vector<4x128xf32>
      %63 = arith.addf %61, %62 : vector<4x128xf32>
      %64 = arith.index_cast %c0_i32_12 : i32 to index
      %c0_24 = arith.constant 0 : index
      %c0_25 = arith.constant 0 : index
      %65 = vector.load %arg9[%64, %c0_24, %c0_25] : memref<4x4x128xf32, #tpu.memory_space<vmem>>, vector<1x4x128xf32>
      %66 = vector.shape_cast %65 : vector<1x4x128xf32> to vector<4x128xf32>
      %67 = vector.shape_cast %63 : vector<4x128xf32> to vector<1x4x128xf32>
      tpu.vector_store %arg9[%64, %c0_24, %c0_25], %67 {strides = array<i32>} : memref<4x4x128xf32, #tpu.memory_space<vmem>>, vector<1x4x128xf32>,
      %c1_i32 = arith.constant 1 : i32
      %68 = arith.addi %3, %c1_i32 : i32
      %c0_26 = arith.constant 0 : index
      %c0_27 = arith.constant 0 : index
      %69 = vector.load %arg10[%c0_26, %c0_27] : memref<4x128xf32, #tpu.memory_space<vmem>>, vector<4x128xf32>
      %70 = arith.index_cast %c1_i32 : i32 to index
      %c0_28 = arith.constant 0 : index
      %c0_29 = arith.constant 0 : index
      %71 = vector.load %arg4[%70, %c0_28, %c0_29] : memref<4x4x384xf32, #tpu.memory_space<vmem>>, vector<1x4x384xf32>
      %72 = vector.shape_cast %71 : vector<1x4x384xf32> to vector<4x384xf32>
      %cst_30 = arith.constant dense<0.000000e+00> : vector<4x384xf32>
      %73 = tpu.matmul %69, %6, %cst_30 {dimension_numbers = #tpu.dot_dimension_numbers<[1], [0], [0], [1], [0, 0, 1, 1], [], []>} : vector<4x128xf32>, vector<128x384xf32>, vector<4x384xf32> -> vector<4x384xf32>
      %74 = vector.broadcast %7 : vector<1x384xf32> to vector<4x384xf32>
      %75 = arith.addf %73, %74 : vector<4x384xf32>
      %76 = vector.extract_strided_slice %72 {offsets = [0, 0], sizes = [4, 128], strides = [1, 1]} : vector<4x384xf32> to vector<4x128xf32>
      %77 = vector.extract_strided_slice %75 {offsets = [0, 0], sizes = [4, 128], strides = [1, 1]} : vector<4x384xf32> to vector<4x128xf32>
      %78 = arith.addf %76, %77 : vector<4x128xf32>
      %79 = arith.negf %78 : vector<4x128xf32>
      %80 = math.exp %79 : vector<4x128xf32>
      %cst_31 = arith.constant 1.000000e+00 : f32
      %81 = vector.broadcast %cst_31 : f32 to vector<4x128xf32>
      %82 = arith.addf %81, %80 : vector<4x128xf32>
      %83 = arith.divf %81, %82 : vector<4x128xf32>
      %84 = vector.extract_strided_slice %72 {offsets = [0, 128], sizes = [4, 128], strides = [1, 1]} : vector<4x384xf32> to vector<4x128xf32>
      %85 = vector.extract_strided_slice %75 {offsets = [0, 128], sizes = [4, 128], strides = [1, 1]} : vector<4x384xf32> to vector<4x128xf32>
      %86 = arith.addf %84, %85 : vector<4x128xf32>
      %87 = arith.negf %86 : vector<4x128xf32>
      %88 = math.exp %87 : vector<4x128xf32>
      %cst_32 = arith.constant 1.000000e+00 : f32
      %89 = vector.broadcast %cst_32 : f32 to vector<4x128xf32>
      %90 = arith.addf %89, %88 : vector<4x128xf32>
      %91 = arith.divf %89, %90 : vector<4x128xf32>
      %92 = vector.extract_strided_slice %72 {offsets = [0, 256], sizes = [4, 128], strides = [1, 1]} : vector<4x384xf32> to vector<4x128xf32>
      %93 = vector.extract_strided_slice %75 {offsets = [0, 256], sizes = [4, 128], strides = [1, 1]} : vector<4x384xf32> to vector<4x128xf32>
      %94 = arith.mulf %83, %93 : vector<4x128xf32>
      %95 = arith.addf %92, %94 : vector<4x128xf32>
      %96 = math.tanh %95 : vector<4x128xf32>
      %cst_33 = arith.constant 1.000000e+00 : f32
      %97 = vector.broadcast %cst_33 : f32 to vector<4x128xf32>
      %98 = arith.subf %97, %91 : vector<4x128xf32>
      %99 = arith.mulf %98, %96 : vector<4x128xf32>
      %100 = arith.mulf %91, %69 : vector<4x128xf32>
      %101 = arith.addf %99, %100 : vector<4x128xf32>
      %102 = vector.broadcast %68 : i32 to vector<4x1xi32>
      %103 = arith.cmpi slt, %102, %10 : vector<4x1xi32>
      %104 = vector.shape_cast %103 : vector<4x1xi1> to vector<4x1xi1>
      %105 = vector.broadcast %104 : vector<4x1xi1> to vector<4x128xi1>
      %106 = arith.select %105, %101, %69 : vector<4x128xi1>, vector<4x128xf32>
      %c0_34 = arith.constant 0 : index
      %c0_35 = arith.constant 0 : index
      %107 = vector.load %arg10[%c0_34, %c0_35] : memref<4x128xf32, #tpu.memory_space<vmem>>, vector<4x128xf32>
      tpu.vector_store %arg10[%c0_34, %c0_35], %106 {strides = array<i32>} : memref<4x128xf32, #tpu.memory_space<vmem>>, vector<4x128xf32>,
      %cst_36 = arith.constant 0.000000e+00 : f32
      %108 = vector.shape_cast %103 : vector<4x1xi1> to vector<4x1xi1>
      %109 = vector.broadcast %108 : vector<4x1xi1> to vector<4x128xi1>
      %110 = vector.broadcast %cst_36 : f32 to vector<4x128xf32>
      %111 = arith.select %109, %101, %110 : vector<4x128xi1>, vector<4x128xf32>
      %cst_37 = arith.constant dense<0.000000e+00> : vector<4x128xf32>
      %112 = tpu.matmul %111, %8, %cst_37 {dimension_numbers = #tpu.dot_dimension_numbers<[1], [0], [0], [1], [0, 0, 1, 1], [], []>} : vector<4x128xf32>, vector<128x128xf32>, vector<4x128xf32> -> vector<4x128xf32>
      %113 = vector.broadcast %9 : vector<1x128xf32> to vector<4x128xf32>
      %114 = arith.addf %112, %113 : vector<4x128xf32>
      %115 = arith.index_cast %c1_i32 : i32 to index
      %c0_38 = arith.constant 0 : index
      %c0_39 = arith.constant 0 : index
      %116 = vector.load %arg9[%115, %c0_38, %c0_39] : memref<4x4x128xf32, #tpu.memory_space<vmem>>, vector<1x4x128xf32>
      %117 = vector.shape_cast %116 : vector<1x4x128xf32> to vector<4x128xf32>
      %118 = vector.shape_cast %114 : vector<4x128xf32> to vector<1x4x128xf32>
      tpu.vector_store %arg9[%115, %c0_38, %c0_39], %118 {strides = array<i32>} : memref<4x4x128xf32, #tpu.memory_space<vmem>>, vector<1x4x128xf32>,
      %c2_i32 = arith.constant 2 : i32
      %119 = arith.addi %3, %c2_i32 : i32
      %c0_40 = arith.constant 0 : index
      %c0_41 = arith.constant 0 : index
      %120 = vector.load %arg10[%c0_40, %c0_41] : memref<4x128xf32, #tpu.memory_space<vmem>>, vector<4x128xf32>
      %121 = arith.index_cast %c2_i32 : i32 to index
      %c0_42 = arith.constant 0 : index
      %c0_43 = arith.constant 0 : index
      %122 = vector.load %arg4[%121, %c0_42, %c0_43] : memref<4x4x384xf32, #tpu.memory_space<vmem>>, vector<1x4x384xf32>
      %123 = vector.shape_cast %122 : vector<1x4x384xf32> to vector<4x384xf32>
      %cst_44 = arith.constant dense<0.000000e+00> : vector<4x384xf32>
      %124 = tpu.matmul %120, %6, %cst_44 {dimension_numbers = #tpu.dot_dimension_numbers<[1], [0], [0], [1], [0, 0, 1, 1], [], []>} : vector<4x128xf32>, vector<128x384xf32>, vector<4x384xf32> -> vector<4x384xf32>
      %125 = vector.broadcast %7 : vector<1x384xf32> to vector<4x384xf32>
      %126 = arith.addf %124, %125 : vector<4x384xf32>
      %127 = vector.extract_strided_slice %123 {offsets = [0, 0], sizes = [4, 128], strides = [1, 1]} : vector<4x384xf32> to vector<4x128xf32>
      %128 = vector.extract_strided_slice %126 {offsets = [0, 0], sizes = [4, 128], strides = [1, 1]} : vector<4x384xf32> to vector<4x128xf32>
      %129 = arith.addf %127, %128 : vector<4x128xf32>
      %130 = arith.negf %129 : vector<4x128xf32>
      %131 = math.exp %130 : vector<4x128xf32>
      %cst_45 = arith.constant 1.000000e+00 : f32
      %132 = vector.broadcast %cst_45 : f32 to vector<4x128xf32>
      %133 = arith.addf %132, %131 : vector<4x128xf32>
      %134 = arith.divf %132, %133 : vector<4x128xf32>
      %135 = vector.extract_strided_slice %123 {offsets = [0, 128], sizes = [4, 128], strides = [1, 1]} : vector<4x384xf32> to vector<4x128xf32>
      %136 = vector.extract_strided_slice %126 {offsets = [0, 128], sizes = [4, 128], strides = [1, 1]} : vector<4x384xf32> to vector<4x128xf32>
      %137 = arith.addf %135, %136 : vector<4x128xf32>
      %138 = arith.negf %137 : vector<4x128xf32>
      %139 = math.exp %138 : vector<4x128xf32>
      %cst_46 = arith.constant 1.000000e+00 : f32
      %140 = vector.broadcast %cst_46 : f32 to vector<4x128xf32>
      %141 = arith.addf %140, %139 : vector<4x128xf32>
      %142 = arith.divf %140, %141 : vector<4x128xf32>
      %143 = vector.extract_strided_slice %123 {offsets = [0, 256], sizes = [4, 128], strides = [1, 1]} : vector<4x384xf32> to vector<4x128xf32>
      %144 = vector.extract_strided_slice %126 {offsets = [0, 256], sizes = [4, 128], strides = [1, 1]} : vector<4x384xf32> to vector<4x128xf32>
      %145 = arith.mulf %134, %144 : vector<4x128xf32>
      %146 = arith.addf %143, %145 : vector<4x128xf32>
      %147 = math.tanh %146 : vector<4x128xf32>
      %cst_47 = arith.constant 1.000000e+00 : f32
      %148 = vector.broadcast %cst_47 : f32 to vector<4x128xf32>
      %149 = arith.subf %148, %142 : vector<4x128xf32>
      %150 = arith.mulf %149, %147 : vector<4x128xf32>
      %151 = arith.mulf %142, %120 : vector<4x128xf32>
      %152 = arith.addf %150, %151 : vector<4x128xf32>
      %153 = vector.broadcast %119 : i32 to vector<4x1xi32>
      %154 = arith.cmpi slt, %153, %10 : vector<4x1xi32>
      %155 = vector.shape_cast %154 : vector<4x1xi1> to vector<4x1xi1>
      %156 = vector.broadcast %155 : vector<4x1xi1> to vector<4x128xi1>
      %157 = arith.select %156, %152, %120 : vector<4x128xi1>, vector<4x128xf32>
      %c0_48 = arith.constant 0 : index
      %c0_49 = arith.constant 0 : index
      %158 = vector.load %arg10[%c0_48, %c0_49] : memref<4x128xf32, #tpu.memory_space<vmem>>, vector<4x128xf32>
      tpu.vector_store %arg10[%c0_48, %c0_49], %157 {strides = array<i32>} : memref<4x128xf32, #tpu.memory_space<vmem>>, vector<4x128xf32>,
      %cst_50 = arith.constant 0.000000e+00 : f32
      %159 = vector.shape_cast %154 : vector<4x1xi1> to vector<4x1xi1>
      %160 = vector.broadcast %159 : vector<4x1xi1> to vector<4x128xi1>
      %161 = vector.broadcast %cst_50 : f32 to vector<4x128xf32>
      %162 = arith.select %160, %152, %161 : vector<4x128xi1>, vector<4x128xf32>
      %cst_51 = arith.constant dense<0.000000e+00> : vector<4x128xf32>
      %163 = tpu.matmul %162, %8, %cst_51 {dimension_numbers = #tpu.dot_dimension_numbers<[1], [0], [0], [1], [0, 0, 1, 1], [], []>} : vector<4x128xf32>, vector<128x128xf32>, vector<4x128xf32> -> vector<4x128xf32>
      %164 = vector.broadcast %9 : vector<1x128xf32> to vector<4x128xf32>
      %165 = arith.addf %163, %164 : vector<4x128xf32>
      %166 = arith.index_cast %c2_i32 : i32 to index
      %c0_52 = arith.constant 0 : index
      %c0_53 = arith.constant 0 : index
      %167 = vector.load %arg9[%166, %c0_52, %c0_53] : memref<4x4x128xf32, #tpu.memory_space<vmem>>, vector<1x4x128xf32>
      %168 = vector.shape_cast %167 : vector<1x4x128xf32> to vector<4x128xf32>
      %169 = vector.shape_cast %165 : vector<4x128xf32> to vector<1x4x128xf32>
      tpu.vector_store %arg9[%166, %c0_52, %c0_53], %169 {strides = array<i32>} : memref<4x4x128xf32, #tpu.memory_space<vmem>>, vector<1x4x128xf32>,
      %c3_i32 = arith.constant 3 : i32
      %170 = arith.addi %3, %c3_i32 : i32
      %c0_54 = arith.constant 0 : index
      %c0_55 = arith.constant 0 : index
      %171 = vector.load %arg10[%c0_54, %c0_55] : memref<4x128xf32, #tpu.memory_space<vmem>>, vector<4x128xf32>
      %172 = arith.index_cast %c3_i32 : i32 to index
      %c0_56 = arith.constant 0 : index
      %c0_57 = arith.constant 0 : index
      %173 = vector.load %arg4[%172, %c0_56, %c0_57] : memref<4x4x384xf32, #tpu.memory_space<vmem>>, vector<1x4x384xf32>
      %174 = vector.shape_cast %173 : vector<1x4x384xf32> to vector<4x384xf32>
      %cst_58 = arith.constant dense<0.000000e+00> : vector<4x384xf32>
      %175 = tpu.matmul %171, %6, %cst_58 {dimension_numbers = #tpu.dot_dimension_numbers<[1], [0], [0], [1], [0, 0, 1, 1], [], []>} : vector<4x128xf32>, vector<128x384xf32>, vector<4x384xf32> -> vector<4x384xf32>
      %176 = vector.broadcast %7 : vector<1x384xf32> to vector<4x384xf32>
      %177 = arith.addf %175, %176 : vector<4x384xf32>
      %178 = vector.extract_strided_slice %174 {offsets = [0, 0], sizes = [4, 128], strides = [1, 1]} : vector<4x384xf32> to vector<4x128xf32>
      %179 = vector.extract_strided_slice %177 {offsets = [0, 0], sizes = [4, 128], strides = [1, 1]} : vector<4x384xf32> to vector<4x128xf32>
      %180 = arith.addf %178, %179 : vector<4x128xf32>
      %181 = arith.negf %180 : vector<4x128xf32>
      %182 = math.exp %181 : vector<4x128xf32>
      %cst_59 = arith.constant 1.000000e+00 : f32
      %183 = vector.broadcast %cst_59 : f32 to vector<4x128xf32>
      %184 = arith.addf %183, %182 : vector<4x128xf32>
      %185 = arith.divf %183, %184 : vector<4x128xf32>
      %186 = vector.extract_strided_slice %174 {offsets = [0, 128], sizes = [4, 128], strides = [1, 1]} : vector<4x384xf32> to vector<4x128xf32>
      %187 = vector.extract_strided_slice %177 {offsets = [0, 128], sizes = [4, 128], strides = [1, 1]} : vector<4x384xf32> to vector<4x128xf32>
      %188 = arith.addf %186, %187 : vector<4x128xf32>
      %189 = arith.negf %188 : vector<4x128xf32>
      %190 = math.exp %189 : vector<4x128xf32>
      %cst_60 = arith.constant 1.000000e+00 : f32
      %191 = vector.broadcast %cst_60 : f32 to vector<4x128xf32>
      %192 = arith.addf %191, %190 : vector<4x128xf32>
      %193 = arith.divf %191, %192 : vector<4x128xf32>
      %194 = vector.extract_strided_slice %174 {offsets = [0, 256], sizes = [4, 128], strides = [1, 1]} : vector<4x384xf32> to vector<4x128xf32>
      %195 = vector.extract_strided_slice %177 {offsets = [0, 256], sizes = [4, 128], strides = [1, 1]} : vector<4x384xf32> to vector<4x128xf32>
      %196 = arith.mulf %185, %195 : vector<4x128xf32>
      %197 = arith.addf %194, %196 : vector<4x128xf32>
      %198 = math.tanh %197 : vector<4x128xf32>
      %cst_61 = arith.constant 1.000000e+00 : f32
      %199 = vector.broadcast %cst_61 : f32 to vector<4x128xf32>
      %200 = arith.subf %199, %193 : vector<4x128xf32>
      %201 = arith.mulf %200, %198 : vector<4x128xf32>
      %202 = arith.mulf %193, %171 : vector<4x128xf32>
      %203 = arith.addf %201, %202 : vector<4x128xf32>
      %204 = vector.broadcast %170 : i32 to vector<4x1xi32>
      %205 = arith.cmpi slt, %204, %10 : vector<4x1xi32>
      %206 = vector.shape_cast %205 : vector<4x1xi1> to vector<4x1xi1>
      %207 = vector.broadcast %206 : vector<4x1xi1> to vector<4x128xi1>
      %208 = arith.select %207, %203, %171 : vector<4x128xi1>, vector<4x128xf32>
      %c0_62 = arith.constant 0 : index
      %c0_63 = arith.constant 0 : index
      %209 = vector.load %arg10[%c0_62, %c0_63] : memref<4x128xf32, #tpu.memory_space<vmem>>, vector<4x128xf32>
      tpu.vector_store %arg10[%c0_62, %c0_63], %208 {strides = array<i32>} : memref<4x128xf32, #tpu.memory_space<vmem>>, vector<4x128xf32>,
      %cst_64 = arith.constant 0.000000e+00 : f32
      %210 = vector.shape_cast %205 : vector<4x1xi1> to vector<4x1xi1>
      %211 = vector.broadcast %210 : vector<4x1xi1> to vector<4x128xi1>
      %212 = vector.broadcast %cst_64 : f32 to vector<4x128xf32>
      %213 = arith.select %211, %203, %212 : vector<4x128xi1>, vector<4x128xf32>
      %cst_65 = arith.constant dense<0.000000e+00> : vector<4x128xf32>
      %214 = tpu.matmul %213, %8, %cst_65 {dimension_numbers = #tpu.dot_dimension_numbers<[1], [0], [0], [1], [0, 0, 1, 1], [], []>} : vector<4x128xf32>, vector<128x128xf32>, vector<4x128xf32> -> vector<4x128xf32>
      %215 = vector.broadcast %9 : vector<1x128xf32> to vector<4x128xf32>
      %216 = arith.addf %214, %215 : vector<4x128xf32>
      %217 = arith.index_cast %c3_i32 : i32 to index
      %c0_66 = arith.constant 0 : index
      %c0_67 = arith.constant 0 : index
      %218 = vector.load %arg9[%217, %c0_66, %c0_67] : memref<4x4x128xf32, #tpu.memory_space<vmem>>, vector<1x4x128xf32>
      %219 = vector.shape_cast %218 : vector<1x4x128xf32> to vector<4x128xf32>
      %220 = vector.shape_cast %216 : vector<4x128xf32> to vector<1x4x128xf32>
      tpu.vector_store %arg9[%217, %c0_66, %c0_67], %220 {strides = array<i32>} : memref<4x4x128xf32, #tpu.memory_space<vmem>>, vector<1x4x128xf32>,
      %c4_i32_68 = arith.constant 4 : i32
    } else {
    }
    %14 = arith.cmpi sge, %3, %5 : i32
    %15 = arith.extui %14 : i1 to i32
    %c0_i32_11 = arith.constant 0 : i32
    %16 = arith.cmpi ne, %15, %c0_i32_11 : i32
    scf.if %16 {
      %17 = vector.shape_cast %9 : vector<1x128xf32> to vector<1x1x128xf32>
      %18 = vector.broadcast %17 : vector<1x1x128xf32> to vector<4x4x128xf32>
      %c0_12 = arith.constant 0 : index
      %c0_13 = arith.constant 0 : index
      %c0_14 = arith.constant 0 : index
      %19 = vector.load %arg9[%c0_12, %c0_13, %c0_14] : memref<4x4x128xf32, #tpu.memory_space<vmem>>, vector<4x4x128xf32>
      tpu.vector_store %arg9[%c0_12, %c0_13, %c0_14], %18 {strides = array<i32>} : memref<4x4x128xf32, #tpu.memory_space<vmem>>, vector<4x4x128xf32>,
    } else {
    }
    return
  }
  func.func @transform_0(%arg0: i32, %arg1: i32, %arg2: memref<1xi32, #tpu.memory_space<smem>>) -> (i32, i32) {
    %c0_i32 = arith.constant 0 : i32
    %c0_i32_0 = arith.constant 0 : i32
    return %arg0, %c0_i32 : i32, i32
  }
  func.func @transform_1(%arg0: i32, %arg1: i32, %arg2: memref<1xi32, #tpu.memory_space<smem>>) -> (i32, i32, i32) {
    %c0_i32 = arith.constant 0 : i32
    %c0_i32_0 = arith.constant 0 : i32
    return %arg1, %arg0, %c0_i32 : i32, i32, i32
  }
  func.func @transform_2(%arg0: i32, %arg1: i32, %arg2: memref<1xi32, #tpu.memory_space<smem>>) -> (i32, i32) {
    %c0_i32 = arith.constant 0 : i32
    %c0_i32_0 = arith.constant 0 : i32
    %c0_i32_1 = arith.constant 0 : i32
    return %c0_i32, %c0_i32_0 : i32, i32
  }
  func.func @transform_3(%arg0: i32, %arg1: i32, %arg2: memref<1xi32, #tpu.memory_space<smem>>) -> (i32, i32) {
    %c0_i32 = arith.constant 0 : i32
    %c0_i32_0 = arith.constant 0 : i32
    %c0_i32_1 = arith.constant 0 : i32
    return %c0_i32, %c0_i32_0 : i32, i32
  }
  func.func @transform_4(%arg0: i32, %arg1: i32, %arg2: memref<1xi32, #tpu.memory_space<smem>>) -> (i32, i32) {
    %c0_i32 = arith.constant 0 : i32
    %c0_i32_0 = arith.constant 0 : i32
    %c0_i32_1 = arith.constant 0 : i32
    return %c0_i32, %c0_i32_0 : i32, i32
  }
  func.func @transform_5(%arg0: i32, %arg1: i32, %arg2: memref<1xi32, #tpu.memory_space<smem>>) -> (i32, i32) {
    %c0_i32 = arith.constant 0 : i32
    %c0_i32_0 = arith.constant 0 : i32
    %c0_i32_1 = arith.constant 0 : i32
    return %c0_i32, %c0_i32_0 : i32, i32
  }
  func.func @transform_6(%arg0: i32, %arg1: i32, %arg2: memref<1xi32, #tpu.memory_space<smem>>) -> (i32, i32, i32) {
    %c0_i32 = arith.constant 0 : i32
    %c0_i32_0 = arith.constant 0 : i32
    return %arg1, %arg0, %c0_i32 : i32, i32, i32
  }
}

</mosaic_0001>

<llo_original>
// kernel: _encoder_impl.2
$region0: #{_encoder_impl.2}
  #allocation0 [shape = 'u32[]', space=smem, size = 0x4, offset = 0x4, fixed_abs, tag = 'smem constant byte address 0x4 - core index']
  #allocation1 [shape = 'u32[144,128]{1,0:T(1,128)}', space=vmem, size = 0x12000, scoped, tag = 'internal scratch']
  %s0 = inlined_call_operand.vmem [shape: f32[48,16], index: 0, kind: input, shape index: {}]
  %s1 = inlined_call_operand.vmem [shape: f32[16,384], index: 1, kind: input, shape index: {}]
  %s2 = inlined_call_operand.vmem [shape: f32[1,384], index: 2, kind: input, shape index: {}]
  %s3 = inlined_call_operand.vmem [shape: f32[48,384], index: 3, kind: output, shape index: {}]
  %s4 = sld [smem:[#allocation0]]
  $region22: #{_encoder_impl.2} parent=0
    _
  %s6 = ssub.s32 1, %s4
  %s7 = scalar_select 0, %s6, %s4
  // Predicated region
  $region2: #{_encoder_impl.2} parent=0 // pred_check
    _
  $region3: #{_encoder_impl.2} parent=0 // pred_check_branch
    %9 = sbr.rel (0) target = $region5
  $region4: #{_encoder_impl.2} parent=0 // pred_region
    _
  $region5: #{_encoder_impl.2} parent=0 // pred_fallthru
    _
  // Predicated region
  $region6: #{_encoder_impl.2} parent=0 // pred_check
    _
  $region7: #{_encoder_impl.2} parent=0 // pred_check_branch
    %11 = sbr.rel (0) target = $region9
  $region8: #{_encoder_impl.2} parent=0 // pred_region
    _
  $region9: #{_encoder_impl.2} parent=0 // pred_fallthru
    _
  // Predicated region
  $region10: #{_encoder_impl.2} parent=0 // pred_check
    _
  $region11: #{_encoder_impl.2} parent=0 // pred_check_branch
    %13 = sbr.rel (0) target = $region13
  $region12: #{_encoder_impl.2} parent=0 // pred_region
    _
  $region13: #{_encoder_impl.2} parent=0 // pred_fallthru
    _
  %v14 = vld [vmem:[%s0] sm:$0xff]
  %v15 = vld [vmem:[%s0 + $0x8] sm:$0xff]
  %v16 = vld [vmem:[%s0 + $0x10] sm:$0xff]
  %v17 = vld [vmem:[%s0 + $0x18] sm:$0xff]
  %v18 = vld [vmem:[%s0 + $0x20] sm:$0xff]
  %v19 = vld [vmem:[%s0 + $0x28] sm:$0xff]
  %v20 = vld [vmem:[%s1] sm:$0xff]
  %v21 = vld [vmem:[%s1 + $0x8] sm:$0xff]
  %v22 = vld [vmem:[%s1 + $0x10] sm:$0xff]
  %v23 = vld [vmem:[%s1 + $0x18] sm:$0xff]
  %v24 = vld [vmem:[%s1 + $0x20] sm:$0xff]
  %v25 = vld [vmem:[%s1 + $0x28] sm:$0xff]
  %v26 = vld [vmem:[%s2] sm:$0x7]
  %v28 = vlaneseq
  %v29 = vshrl.u32 %v28, 7
  %v30 = vsub.s32 0, %v29
  %v31 = vrot.slane %v26, %v30
  %v32 = vlaneseq
  %v33 = vshrl.u32 %v32, 7
  %v34 = vsub.s32 1, %v33
  %v35 = vrot.slane %v26, %v34
  %v36 = vlaneseq
  %v37 = vshrl.u32 %v36, 7
  %v38 = vsub.s32 2, %v37
  %v39 = vrot.slane %v26, %v38
  %vm43 = vcmask 130048
  %v45 = vsel %vm43, %v14, 0
  %v48 = vsel %vm43, %v15, 0
  %v51 = vsel %vm43, %v16, 0
  %v54 = vsel %vm43, %v17, 0
  %v57 = vsel %vm43, %v18, 0
  %v60 = vsel %vm43, %v19, 0
  %62 = vmatprep.subr.mxu0 %v21
  %63 = vmatpush1.msra.mxu0 %v20
  %64 = vmatprep.subr.mxu0 %v24
  %65 = vmatpush1.msra.mxu0 %v23
  %66 = vmatprep.subr.mxu0 0.0
  %67 = vmatpush1.msra.mxu0 0.0
  %68 = vmatprep.subr.mxu0 0.0
  %69 = vmatpush1.msra.mxu0 0.0
  %70 = vmatprep.subr.mxu0 0.0
  %71 = vmatpush1.msra.mxu0 0.0
  %72 = vmatprep.subr.mxu0 0.0
  %73 = vmatpush1.msra.mxu0 0.0
  %74 = vmatprep.subr.mxu0 0.0
  %75 = vmatpush1.msra.mxu0 0.0
  %76 = vmatprep.subr.mxu0 0.0
  %77 = vmatpush1.msra.mxu0 0.0
  %78 = vmatprep.subr.mxu0 0.0
  %79 = vmatpush1.msra.mxu0 0.0
  %80 = vmatprep.subr.mxu0 0.0
  %81 = vmatpush1.msra.mxu0 0.0
  %82 = vmatprep.subr.mxu0 0.0
  %83 = vmatpush1.msra.mxu0 0.0
  %84 = vmatprep.subr.mxu0 0.0
  %85 = vmatpush1.msra.mxu0 0.0
  %86 = vmatprep.subr.mxu0 0.0
  %87 = vmatpush1.msra.mxu0 0.0
  %88 = vmatprep.subr.mxu0 0.0
  %89 = vmatpush1.msra.mxu0 0.0
  %90 = vmatprep.subr.mxu0 0.0
  %91 = vmatpush1.msra.mxu0 0.0
  %92 = vmatprep.subr.mxu0 0.0
  %93 = vmatpush1.msra.mxu0 0.0
  %94 = vmatprep.subr.mxu0 0.0
  %95 = vmatpush1.msra.mxu0 0.0
  %96 = vmatprep.subr.mxu0 0.0
  %97 = vmatpush1.msra.mxu0 0.0
  %98 = vmatprep.subr.mxu0 0.0
  %99 = vmatpush1.msra.mxu0 0.0
  %100 = vmatprep.subr.mxu0 0.0
  %101 = vmatpush1.msra.mxu0 0.0
  %102 = vmatprep.subr.mxu0 0.0
  %103 = vmatpush1.msra.mxu0 0.0
  %104 = vmatprep.subr.mxu0 0.0
  %105 = vmatpush1.msra.mxu0 0.0
  %106 = vmatprep.subr.mxu0 0.0
  %107 = vmatpush1.msra.mxu0 0.0
  %108 = vmatprep.subr.mxu0 0.0
  %109 = vmatpush1.msra.mxu0 0.0
  %110 = vmatprep.subr.mxu0 0.0
  %111 = vmatpush1.msra.mxu0 0.0
  %112 = vmatprep.subr.mxu0 0.0
  %113 = vmatpush1.msra.mxu0 0.0
  %114 = vmatprep.subr.mxu0 0.0
  %115 = vmatpush1.msra.mxu0 0.0
  %116 = vmatprep.subr.mxu0 0.0
  %117 = vmatpush1.msra.mxu0 0.0
  %118 = vmatprep.subr.mxu0 0.0
  %119 = vmatpush1.msra.mxu0 0.0
  %120 = vmatprep.subr.mxu0 0.0
  %121 = vmatpush1.msra.mxu0 0.0
  %122 = vmatprep.subr.mxu0 0.0
  %123 = vmatpush1.msra.mxu0 0.0
  %124 = vmatprep.subr.mxu0 0.0
  %125 = vmatpush1.msra.mxu0 0.0
  %126 = vmatprep.mubr.f32.mxu0 0.0
  %127 = vmatmul.mubr.f32.gmra.mrb[0].mxu0 %v45
  %v128 = vpop.f32.mrb[0].mxu0
  %v129 = vadd.f32 %v31, %v128
  %v130 = vpop.f32.mrb[0].mxu0
  %v131 = vadd.f32 %v35, %v130
  %132 = vmatprep.mubr.f32.mxu0 0.0
  %133 = vmatmul.mubr.f32.gmra.mrb[0].mxu0 %v48
  %v134 = vpop.f32.mrb[0].mxu0
  %v135 = vadd.f32 %v31, %v134
  %v136 = vpop.f32.mrb[0].mxu0
  %v137 = vadd.f32 %v35, %v136
  %138 = vmatprep.mubr.f32.mxu0 0.0
  %139 = vmatmul.mubr.f32.gmra.mrb[0].mxu0 %v51
  %v140 = vpop.f32.mrb[0].mxu0
  %v141 = vadd.f32 %v31, %v140
  %v142 = vpop.f32.mrb[0].mxu0
  %v143 = vadd.f32 %v35, %v142
  %144 = vmatprep.mubr.f32.mxu0 0.0
  %145 = vmatmul.mubr.f32.gmra.mrb[0].mxu0 %v54
  %v146 = vpop.f32.mrb[0].mxu0
  %v147 = vadd.f32 %v31, %v146
  %v148 = vpop.f32.mrb[0].mxu0
  %v149 = vadd.f32 %v35, %v148
  %150 = vmatprep.mubr.f32.mxu0 0.0
  %151 = vmatmul.mubr.f32.gmra.mrb[0].mxu0 %v57
  %v152 = vpop.f32.mrb[0].mxu0
  %v153 = vadd.f32 %v31, %v152
  %v154 = vpop.f32.mrb[0].mxu0
  %v155 = vadd.f32 %v35, %v154
  %156 = vmatprep.mubr.f32.mxu0 0.0
  %157 = vmatmul.mubr.f32.gmra.mrb[0].mxu0 %v60
  %v158 = vpop.f32.mrb[0].mxu0
  %v159 = vadd.f32 %v31, %v158
  %v160 = vpop.f32.mrb[0].mxu0
  %v161 = vadd.f32 %v35, %v160
  %162 = vdwg.mxu0
  %163 = vmatprep.subr.mxu0 0.0
  %164 = vmatpush1.msra.mxu0 %v22
  %165 = vmatprep.subr.mxu0 0.0
  %166 = vmatpush1.msra.mxu0 %v25
  %167 = vmatprep.subr.mxu0 0.0
  %168 = vmatpush1.msra.mxu0 0.0
  %169 = vmatprep.subr.mxu0 0.0
  %170 = vmatpush1.msra.mxu0 0.0
  %171 = vmatprep.subr.mxu0 0.0
  %172 = vmatpush1.msra.mxu0 0.0
  %173 = vmatprep.subr.mxu0 0.0
  %174 = vmatpush1.msra.mxu0 0.0
  %175 = vmatprep.subr.mxu0 0.0
  %176 = vmatpush1.msra.mxu0 0.0
  %177 = vmatprep.subr.mxu0 0.0
  %178 = vmatpush1.msra.mxu0 0.0
  %179 = vmatprep.subr.mxu0 0.0
  %180 = vmatpush1.msra.mxu0 0.0
  %181 = vmatprep.subr.mxu0 0.0
  %182 = vmatpush1.msra.mxu0 0.0
  %183 = vmatprep.subr.mxu0 0.0
  %184 = vmatpush1.msra.mxu0 0.0
  %185 = vmatprep.subr.mxu0 0.0
  %186 = vmatpush1.msra.mxu0 0.0
  %187 = vmatprep.subr.mxu0 0.0
  %188 = vmatpush1.msra.mxu0 0.0
  %189 = vmatprep.subr.mxu0 0.0
  %190 = vmatpush1.msra.mxu0 0.0
  %191 = vmatprep.subr.mxu0 0.0
  %192 = vmatpush1.msra.mxu0 0.0
  %193 = vmatprep.subr.mxu0 0.0
  %194 = vmatpush1.msra.mxu0 0.0
  %195 = vmatprep.subr.mxu0 0.0
  %196 = vmatpush1.msra.mxu0 0.0
  %197 = vmatprep.subr.mxu0 0.0
  %198 = vmatpush1.msra.mxu0 0.0
  %199 = vmatprep.subr.mxu0 0.0
  %200 = vmatpush1.msra.mxu0 0.0
  %201 = vmatprep.subr.mxu0 0.0
  %202 = vmatpush1.msra.mxu0 0.0
  %203 = vmatprep.subr.mxu0 0.0
  %204 = vmatpush1.msra.mxu0 0.0
  %205 = vmatprep.subr.mxu0 0.0
  %206 = vmatpush1.msra.mxu0 0.0
  %207 = vmatprep.subr.mxu0 0.0
  %208 = vmatpush1.msra.mxu0 0.0
  %209 = vmatprep.subr.mxu0 0.0
  %210 = vmatpush1.msra.mxu0 0.0
  %211 = vmatprep.subr.mxu0 0.0
  %212 = vmatpush1.msra.mxu0 0.0
  %213 = vmatprep.subr.mxu0 0.0
  %214 = vmatpush1.msra.mxu0 0.0
  %215 = vmatprep.subr.mxu0 0.0
  %216 = vmatpush1.msra.mxu0 0.0
  %217 = vmatprep.subr.mxu0 0.0
  %218 = vmatpush1.msra.mxu0 0.0
  %219 = vmatprep.subr.mxu0 0.0
  %220 = vmatpush1.msra.mxu0 0.0
  %221 = vmatprep.subr.mxu0 0.0
  %222 = vmatpush1.msra.mxu0 0.0
  %223 = vmatprep.subr.mxu0 0.0
  %224 = vmatpush1.msra.mxu0 0.0
  %225 = vmatprep.subr.mxu0 0.0
  %226 = vmatpush1.msra.mxu0 0.0
  %227 = vmatprep.mubr.f32.mxu0 0.0
  %228 = vmatmul.mubr.f32.gmra.mrb[0].mxu0 %v45
  %v229 = vpop.f32.mrb[0].mxu0
  %v230 = vadd.f32 %v39, %v229
  %v231 = vpop.f32.mrb[0].mxu0
  %232 = vmatprep.mubr.f32.mxu0 0.0
  %233 = vmatmul.mubr.f32.gmra.mrb[0].mxu0 %v48
  %v234 = vpop.f32.mrb[0].mxu0
  %v235 = vadd.f32 %v39, %v234
  %v236 = vpop.f32.mrb[0].mxu0
  %237 = vmatprep.mubr.f32.mxu0 0.0
  %238 = vmatmul.mubr.f32.gmra.mrb[0].mxu0 %v51
  %v239 = vpop.f32.mrb[0].mxu0
  %v240 = vadd.f32 %v39, %v239
  %v241 = vpop.f32.mrb[0].mxu0
  %242 = vmatprep.mubr.f32.mxu0 0.0
  %243 = vmatmul.mubr.f32.gmra.mrb[0].mxu0 %v54
  %v244 = vpop.f32.mrb[0].mxu0
  %v245 = vadd.f32 %v39, %v244
  %v246 = vpop.f32.mrb[0].mxu0
  %247 = vmatprep.mubr.f32.mxu0 0.0
  %248 = vmatmul.mubr.f32.gmra.mrb[0].mxu0 %v57
  %v249 = vpop.f32.mrb[0].mxu0
  %v250 = vadd.f32 %v39, %v249
  %v251 = vpop.f32.mrb[0].mxu0
  %252 = vmatprep.mubr.f32.mxu0 0.0
  %253 = vmatmul.mubr.f32.gmra.mrb[0].mxu0 %v60
  %v254 = vpop.f32.mrb[0].mxu0
  %v255 = vadd.f32 %v39, %v254
  %v256 = vpop.f32.mrb[0].mxu0
  %257 = vdwg.mxu0
  %258 = vst [vmem:[%s3] sm:$0xff] %v129
  %259 = vst [vmem:[%s3 + $0x8] sm:$0xff] %v131
  %260 = vst [vmem:[%s3 + $0x10] sm:$0xff] %v230
  %261 = vst [vmem:[%s3 + $0x18] sm:$0xff] %v135
  %262 = vst [vmem:[%s3 + $0x20] sm:$0xff] %v137
  %263 = vst [vmem:[%s3 + $0x28] sm:$0xff] %v235
  %264 = vst [vmem:[%s3 + $0x30] sm:$0xff] %v141
  %265 = vst [vmem:[%s3 + $0x38] sm:$0xff] %v143
  %266 = vst [vmem:[%s3 + $0x40] sm:$0xff] %v240
  %267 = vst [vmem:[%s3 + $0x48] sm:$0xff] %v147
  %268 = vst [vmem:[%s3 + $0x50] sm:$0xff] %v149
  %269 = vst [vmem:[%s3 + $0x58] sm:$0xff] %v245
  %270 = vst [vmem:[%s3 + $0x60] sm:$0xff] %v153
  %271 = vst [vmem:[%s3 + $0x68] sm:$0xff] %v155
  %272 = vst [vmem:[%s3 + $0x70] sm:$0xff] %v250
  %273 = vst [vmem:[%s3 + $0x78] sm:$0xff] %v159
  %274 = vst [vmem:[%s3 + $0x80] sm:$0xff] %v161
  %275 = vst [vmem:[%s3 + $0x88] sm:$0xff] %v255
  // Predicated region
  $region14: #{_encoder_impl.2} parent=0 // pred_check
    _
  $region15: #{_encoder_impl.2} parent=0 // pred_check_branch
    %277 = sbr.rel (0) target = $region17
  $region16: #{_encoder_impl.2} parent=0 // pred_region
    _
  $region17: #{_encoder_impl.2} parent=0 // pred_fallthru
    _
  // Predicated region
  $region18: #{_encoder_impl.2} parent=0 // pred_check
    _
  $region19: #{_encoder_impl.2} parent=0 // pred_check_branch
    %279 = sbr.rel (0) target = $region21
  $region20: #{_encoder_impl.2} parent=0 // pred_region
    _
  $region21: #{_encoder_impl.2} parent=0 // pred_fallthru
    _

// kernel: _encoder_impl.3
$region0: #{_encoder_impl.3}
  #allocation0 [shape = 'u32[]', space=smem, size = 0x4, offset = 0x4, fixed_abs, tag = 'smem constant byte address 0x4 - core index']
  #allocation1 [shape = 'u32[144,128]{1,0:T(1,128)}', space=vmem, size = 0x12000, scoped, tag = 'internal scratch']
  #allocation2 [shape = 'f32[4,128]{1,0:T(4,128)}', space=vmem, size = 0x800, scoped, tag = 'scratch operand']
  #allocation3 [shape = 's32[1]{0}', space=sflag, size = 0x4, scoped, tag = 'scoped memory for _encoder_impl.3']
  #allocation4 [shape = 's32[1]{0:T(128)S(6)}', space=smem, size = 0x200, scoped, tag = 'prefetched SMEM operand 0']
  %s0 = inlined_call_operand.<no memory space> [shape: s32[1], index: 0, kind: input, shape index: {}]
  %s1 = inlined_call_operand.vmem [shape: s32[4,1], index: 1, kind: input, shape index: {}]
  %s2 = inlined_call_operand.vmem [shape: f32[12,4,384], index: 2, kind: input, shape index: {}]
  %s3 = inlined_call_operand.vmem [shape: f32[128,384], index: 3, kind: input, shape index: {}]
  %s4 = inlined_call_operand.vmem [shape: f32[1,384], index: 4, kind: input, shape index: {}]
  %s5 = inlined_call_operand.vmem [shape: f32[128,128], index: 5, kind: input, shape index: {}]
  %s6 = inlined_call_operand.vmem [shape: f32[1,128], index: 6, kind: input, shape index: {}]
  %s7 = inlined_call_operand.vmem [shape: f32[12,4,128], index: 7, kind: output, shape index: {}]
  %s8 = sld [smem:[#allocation0]]
  $region69: #{_encoder_impl.3} parent=0
    _
  %s10 = ssub.s32 1, %s8
  %s11 = scalar_select 0, %s10, %s8
  %12 = sst [smem:[#allocation4]] %s0
  loop: start=0, step=1, limit=5
  $region2: #{_encoder_impl.3} parent=0 // loop_pre_header
    _
  $region3: #{_encoder_impl.3} parent=0 // loop_header
    %s14 = sphi 0, %s18
    %p15 = scmp.ge.s32.totalorder %s14, 5
    %s21 = sphi 0, %s33
    %s22 = sphi 0, %s29
    %s23 = sphi 0, %s21
    %s24 = sphi 0, %s22
    %s25 = sphi 0, %s23
    %s26 = sphi 0, %s24
    %s36 = sphi 0, %s38
    %s39 = sphi 0, %s36
    %s40 = sphi 0, %s39
    %s56 = sphi 0, %s40
    %s64 = sphi 0, %s66
    %s67 = sphi 0, %s64
    %s68 = sphi 0, %s67
    %s84 = sphi 0, %s68
    %s88 = sphi 0, %s88
    %s90 = sphi 0, %s88
    %s91 = sphi 0, %s90
    %s105 = sphi 0, %s91
    %s109 = sphi 0, %s109
    %s111 = sphi 0, %s109
    %s112 = sphi 0, %s111
    %s126 = sphi 0, %s112
    %s130 = sphi 0, %s130
    %s132 = sphi 0, %s130
    %s133 = sphi 0, %s132
    %s147 = sphi 0, %s133
    %s151 = sphi 0, %s151
    %s153 = sphi 0, %s151
    %s154 = sphi 0, %s153
    %s168 = sphi 0, %s154
    %s176 = sphi 0, %s178
    %s179 = sphi 0, %s176
    %s180 = sphi 0, %s179
    %s196 = sphi 0, %s180
  $region4: #{_encoder_impl.3} parent=0 // loop_header_branch
    %17 = sbr.rel (%p15) target = $region8
  $region5: #{_encoder_impl.3} parent=0 // loop_body
    %s19 = ssub.s32 %s14, 1
    %s20 = ssub.s32 %s14, 2
    %s27 = sadd.s32 1, %s22
    %p28 = scmp.ge.s32.totalorder %s27, 3
    %s29 = scalar_select %p28, 0, %s27
    %s30 = sadd.s32 1, %s21
    %s31 = scalar_select %p28, %s30, %s21
    %p32 = scmp.ge.s32.totalorder %s31, 1
    %s33 = scalar_select %p32, 0, %s31
    %s34 = ssub.s32 %s21, %s33
    %p35 = scmp.eq.s32.totalorder %s34, 0
    %s37 = sadd.s32 %s36, 1
    %s38 = scalar_select %p35, %s36, %s37
    %p41 = pneg %p35
    %p42 = scmp.eq.s32.totalorder %s14, 2
    %p43 = por %p41, %p42
    %p44 = scmp.ne.s32.totalorder %s36, %s39
    %p45 = scmp.eq.s32.totalorder %s14, 0
    %p46 = por %p44, %p45
    %p47 = scmp.ne.s32.totalorder %s36, %s39
    %p48 = scmp.eq.s32.totalorder %s19, 2
    %p49 = por %p47, %p48
    %p50 = scmp.ne.s32.totalorder %s39, %s40
    %p51 = scmp.eq.s32.totalorder %s19, 0
    %p52 = por %p50, %p51
    %p53 = scmp.ne.s32.totalorder %s39, %s40
    %p54 = scmp.eq.s32.totalorder %s20, 2
    %p55 = por %p53, %p54
    %p57 = scmp.ne.s32.totalorder %s40, %s56
    %p58 = scmp.eq.s32.totalorder %s20, 0
    %p59 = por %p57, %p58
    %s60 = ssub.s32 %s22, %s29
    %s61 = ssub.s32 %s21, %s33
    %s62 = sor.u32 %s60, %s61
    %p63 = scmp.eq.s32.totalorder %s62, 0
    %s65 = sadd.s32 %s64, 1
    %s66 = scalar_select %p63, %s64, %s65
    %p69 = pneg %p63
    %p70 = scmp.eq.s32.totalorder %s14, 2
    %p71 = por %p69, %p70
    %p72 = scmp.ne.s32.totalorder %s64, %s67
    %p73 = scmp.eq.s32.totalorder %s14, 0
    %p74 = por %p72, %p73
    %p75 = scmp.ne.s32.totalorder %s64, %s67
    %p76 = scmp.eq.s32.totalorder %s19, 2
    %p77 = por %p75, %p76
    %p78 = scmp.ne.s32.totalorder %s67, %s68
    %p79 = scmp.eq.s32.totalorder %s19, 0
    %p80 = por %p78, %p79
    %p81 = scmp.ne.s32.totalorder %s67, %s68
    %p82 = scmp.eq.s32.totalorder %s20, 2
    %p83 = por %p81, %p82
    %p85 = scmp.ne.s32.totalorder %s68, %s84
    %p86 = scmp.eq.s32.totalorder %s20, 0
    %p87 = por %p85, %p86
    %s89 = sadd.s32 %s88, 1
    %p92 = scmp.eq.s32.totalorder %s14, 2
    %p93 = scmp.ne.s32.totalorder %s88, %s90
    %p94 = scmp.eq.s32.totalorder %s14, 0
    %p95 = por %p93, %p94
    %p96 = scmp.ne.s32.totalorder %s88, %s90
    %p97 = scmp.eq.s32.totalorder %s19, 2
    %p98 = por %p96, %p97
    %p99 = scmp.ne.s32.totalorder %s90, %s91
    %p100 = scmp.eq.s32.totalorder %s19, 0
    %p101 = por %p99, %p100
    %p102 = scmp.ne.s32.totalorder %s90, %s91
    %p103 = scmp.eq.s32.totalorder %s20, 2
    %p104 = por %p102, %p103
    %p106 = scmp.ne.s32.totalorder %s91, %s105
    %p107 = scmp.eq.s32.totalorder %s20, 0
    %p108 = por %p106, %p107
    %s110 = sadd.s32 %s109, 1
    %p113 = scmp.eq.s32.totalorder %s14, 2
    %p114 = scmp.ne.s32.totalorder %s109, %s111
    %p115 = scmp.eq.s32.totalorder %s14, 0
    %p116 = por %p114, %p115
    %p117 = scmp.ne.s32.totalorder %s109, %s111
    %p118 = scmp.eq.s32.totalorder %s19, 2
    %p119 = por %p117, %p118
    %p120 = scmp.ne.s32.totalorder %s111, %s112
    %p121 = scmp.eq.s32.totalorder %s19, 0
    %p122 = por %p120, %p121
    %p123 = scmp.ne.s32.totalorder %s111, %s112
    %p124 = scmp.eq.s32.totalorder %s20, 2
    %p125 = por %p123, %p124
    %p127 = scmp.ne.s32.totalorder %s112, %s126
    %p128 = scmp.eq.s32.totalorder %s20, 0
    %p129 = por %p127, %p128
    %s131 = sadd.s32 %s130, 1
    %p134 = scmp.eq.s32.totalorder %s14, 2
    %p135 = scmp.ne.s32.totalorder %s130, %s132
    %p136 = scmp.eq.s32.totalorder %s14, 0
    %p137 = por %p135, %p136
    %p138 = scmp.ne.s32.totalorder %s130, %s132
    %p139 = scmp.eq.s32.totalorder %s19, 2
    %p140 = por %p138, %p139
    %p141 = scmp.ne.s32.totalorder %s132, %s133
    %p142 = scmp.eq.s32.totalorder %s19, 0
    %p143 = por %p141, %p142
    %p144 = scmp.ne.s32.totalorder %s132, %s133
    %p145 = scmp.eq.s32.totalorder %s20, 2
    %p146 = por %p144, %p145
    %p148 = scmp.ne.s32.totalorder %s133, %s147
    %p149 = scmp.eq.s32.totalorder %s20, 0
    %p150 = por %p148, %p149
    %s152 = sadd.s32 %s151, 1
    %p155 = scmp.eq.s32.totalorder %s14, 2
    %p156 = scmp.ne.s32.totalorder %s151, %s153
    %p157 = scmp.eq.s32.totalorder %s14, 0
    %p158 = por %p156, %p157
    %p159 = scmp.ne.s32.totalorder %s151, %s153
    %p160 = scmp.eq.s32.totalorder %s19, 2
    %p161 = por %p159, %p160
    %p162 = scmp.ne.s32.totalorder %s153, %s154
    %p163 = scmp.eq.s32.totalorder %s19, 0
    %p164 = por %p162, %p163
    %p165 = scmp.ne.s32.totalorder %s153, %s154
    %p166 = scmp.eq.s32.totalorder %s20, 2
    %p167 = por %p165, %p166
    %p169 = scmp.ne.s32.totalorder %s154, %s168
    %p170 = scmp.eq.s32.totalorder %s20, 0
    %p171 = por %p169, %p170
    %s172 = ssub.s32 %s22, %s29
    %s173 = ssub.s32 %s21, %s33
    %s174 = sor.u32 %s172, %s173
    %p175 = scmp.eq.s32.totalorder %s174, 0
    %s177 = sadd.s32 %s176, 1
    %s178 = scalar_select %p175, %s176, %s177
    %p181 = pneg %p175
    %p182 = scmp.eq.s32.totalorder %s14, 2
    %p183 = por %p181, %p182
    %p184 = scmp.ne.s32.totalorder %s176, %s179
    %p185 = scmp.eq.s32.totalorder %s14, 0
    %p186 = por %p184, %p185
    %p187 = scmp.ne.s32.totalorder %s176, %s179
    %p188 = scmp.eq.s32.totalorder %s19, 2
    %p189 = por %p187, %p188
    %p190 = scmp.ne.s32.totalorder %s179, %s180
    %p191 = scmp.eq.s32.totalorder %s19, 0
    %p192 = por %p190, %p191
    %p193 = scmp.ne.s32.totalorder %s179, %s180
    %p194 = scmp.eq.s32.totalorder %s20, 2
    %p195 = por %p193, %p194
    %p197 = scmp.ne.s32.totalorder %s180, %s196
    %p198 = scmp.eq.s32.totalorder %s20, 0
    %p199 = por %p197, %p198
    %p200 = scmp.le.s32.totalorder 1, %s14
    %p201 = scmp.lt.s32.totalorder %s14, 4
    %p202 = pnand %p200, %p201
    %p203 = pneg %p202
    // Predicated region
    $region9: #{_encoder_impl.3} parent=5 // pred_check
      _
    $region10: #{_encoder_impl.3} parent=5 // pred_check_branch
      %205 = sbr.rel (%p202) target = $region12
    $region11: #{_encoder_impl.3} parent=5 // pred_region
      %s206 = ssub.s32 %s14, 1
      // Predicated region
      $region13: #{_encoder_impl.3} parent=11 // pred_check
        %p207 = pneg %p52
      $region14: #{_encoder_impl.3} parent=11 // pred_check_branch
        %209 = sbr.rel (%p207) target = $region16
      $region15: #{_encoder_impl.3} parent=11 // pred_region
        %p210 = scmp.lt.s32.totalorder %s23, 0
        %s211 = scalar_select %p210, %s23, 0
        %s212 = smul.addr %s211, 4
        %s213 = scalar_lea.vmem %s1, %s212
      $region16: #{_encoder_impl.3} parent=11 // pred_fallthru
        _
      // Predicated region
      $region17: #{_encoder_impl.3} parent=11 // pred_check
        %p214 = pneg %p101
      $region18: #{_encoder_impl.3} parent=11 // pred_check_branch
        %216 = sbr.rel (%p214) target = $region20
      $region19: #{_encoder_impl.3} parent=11 // pred_region
        _
      $region20: #{_encoder_impl.3} parent=11 // pred_fallthru
        _
      // Predicated region
      $region21: #{_encoder_impl.3} parent=11 // pred_check
        %p217 = pneg %p122
      $region22: #{_encoder_impl.3} parent=11 // pred_check_branch
        %219 = sbr.rel (%p217) target = $region24
      $region23: #{_encoder_impl.3} parent=11 // pred_region
        _
      $region24: #{_encoder_impl.3} parent=11 // pred_fallthru
        _
      // Predicated region
      $region25: #{_encoder_impl.3} parent=11 // pred_check
        %p220 = pneg %p143
      $region26: #{_encoder_impl.3} parent=11 // pred_check_branch
        %222 = sbr.rel (%p220) target = $region28
      $region27: #{_encoder_impl.3} parent=11 // pred_region
        _
      $region28: #{_encoder_impl.3} parent=11 // pred_fallthru
        _
      // Predicated region
      $region29: #{_encoder_impl.3} parent=11 // pred_check
        %p223 = pneg %p164
      $region30: #{_encoder_impl.3} parent=11 // pred_check_branch
        %225 = sbr.rel (%p223) target = $region32
      $region31: #{_encoder_impl.3} parent=11 // pred_region
        _
      $region32: #{_encoder_impl.3} parent=11 // pred_fallthru
        _
    $region12: #{_encoder_impl.3} parent=5 // pred_fallthru
      _
    %p226 = scmp.lt.s32.totalorder %s14, 3
    // Predicated region
    $region33: #{_encoder_impl.3} parent=5 // pred_check
      %p227 = pneg %p226
    $region34: #{_encoder_impl.3} parent=5 // pred_check_branch
      %229 = sbr.rel (%p227) target = $region36
    $region35: #{_encoder_impl.3} parent=5 // pred_region
      // Predicated region
      $region37: #{_encoder_impl.3} parent=35 // pred_check
        %p230 = pneg %p74
      $region38: #{_encoder_impl.3} parent=35 // pred_check_branch
        %232 = sbr.rel (%p230) target = $region40
      $region39: #{_encoder_impl.3} parent=35 // pred_region
        %s233 = smul.u32 4, %s22
        %p234 = scmp.lt.s32.totalorder %s233, 11
        %s235 = scalar_select %p234, %s233, 11
        %p236 = scmp.lt.s32.totalorder %s21, 0
        %s237 = scalar_select %p236, %s21, 0
        %s238 = smul.addr %s237, 3
        %s239 = smul.addr %s235, 3
        %s240 = sadd.s32 %s238, %s239
        %s241 = smul.addr %s240, 4
        %s242 = scalar_lea.vmem %s2, %s241
        %s243 = smul.u32 4, %s22
      $region40: #{_encoder_impl.3} parent=35 // pred_fallthru
        _
    $region36: #{_encoder_impl.3} parent=5 // pred_fallthru
      _
    %p244 = scmp.le.s32.totalorder 1, %s14
    %p245 = scmp.lt.s32.totalorder %s14, 4
    %p246 = pnand %p244, %p245
    %p247 = pneg %p246
    // Predicated region
    $region41: #{_encoder_impl.3} parent=5 // pred_check
      _
    $region42: #{_encoder_impl.3} parent=5 // pred_check_branch
      %249 = sbr.rel (%p246) target = $region44
    $region43: #{_encoder_impl.3} parent=5 // pred_region
      %s250 = ssub.s32 %s14, 1
      %p251 = scmp.lt.s32.totalorder %s23, 0
      %s252 = scalar_select %p251, %s23, 0
      %s253 = smul.addr %s252, 4
      %s254 = scalar_lea.vmem %s1, %s253
      %p255 = pneg %p52
      %p256 = pneg %p49
      %s257 = smul.u32 4, %s24
      %p258 = scmp.lt.s32.totalorder %s257, 11
      %s259 = scalar_select %p258, %s257, 11
      %p260 = scmp.lt.s32.totalorder %s23, 0
      %s261 = scalar_select %p260, %s23, 0
      %s262 = smul.addr %s261, 3
      %s263 = smul.addr %s259, 3
      %s264 = sadd.s32 %s262, %s263
      %s265 = smul.addr %s264, 4
      %s266 = scalar_lea.vmem %s2, %s265
      %p267 = pneg %p80
      %p268 = pneg %p77
      %p269 = pneg %p101
      %p270 = pneg %p98
      %p271 = pneg %p122
      %p272 = pneg %p119
      %p273 = pneg %p143
      %p274 = pneg %p140
      %p275 = pneg %p164
      %p276 = pneg %p161
      %p277 = pneg %p192
      %p278 = pneg %p189
      %s279 = smul.u32 4, %s24
      %p280 = scmp.lt.s32.totalorder %s279, 11
      %s281 = scalar_select %p280, %s279, 11
      %p282 = scmp.lt.s32.totalorder %s23, 0
      %s283 = scalar_select %p282, %s23, 0
      %s284 = sadd.s32 %s283, %s281
      %s285 = smul.addr %s284, 4
      %s286 = scalar_lea.vmem %s7, %s285
      %p287 = scmp.lt.s32.totalorder %s23, 0
      %s288 = scalar_select %p287, %s23, 0
      %s289 = smul.addr %s288, 4
      %s290 = scalar_lea.vmem %s1, %s289
      %s291 = smul.u32 4, %s24
      %p292 = scmp.lt.s32.totalorder %s291, 11
      %s293 = scalar_select %p292, %s291, 11
      %p294 = scmp.lt.s32.totalorder %s23, 0
      %s295 = scalar_select %p294, %s23, 0
      %s296 = smul.addr %s295, 3
      %s297 = smul.addr %s293, 3
      %s298 = sadd.s32 %s296, %s297
      %s299 = smul.addr %s298, 4
      %s300 = scalar_lea.vmem %s2, %s299
      %s301 = smul.u32 4, %s24
      %s302 = smul.u32 4, %s24
      %p303 = scmp.lt.s32.totalorder %s302, 11
      %s304 = scalar_select %p303, %s302, 11
      %p305 = scmp.lt.s32.totalorder %s23, 0
      %s306 = scalar_select %p305, %s23, 0
      %s307 = sadd.s32 %s306, %s304
      %s308 = smul.addr %s307, 4
      %s309 = scalar_lea.vmem %s7, %s308
      %s310 = smul.u32 4, %s24
      %p311 = scmp.eq.s32.totalorder %s24, 0
      // Predicated region
      $region45: #{_encoder_impl.3} parent=43 // pred_check
        %p312 = pneg %p311
      $region46: #{_encoder_impl.3} parent=43 // pred_check_branch
        %314 = sbr.rel (%p312) target = $region48
      $region47: #{_encoder_impl.3} parent=43 // pred_region
        %315 = vst [vmem:[#allocation2] sm:$0xf] 0.0
      $region48: #{_encoder_impl.3} parent=43 // pred_fallthru
        _
      %s316 = smul.u32 %s24, 4
      %s317 = sld [smem:[#allocation4 + %s23]]
      %v318 = vld [vmem:[%s3] sm:$0xff]
      %v319 = vld [vmem:[%s3 + $0x8] sm:$0xff]
      %v320 = vld [vmem:[%s3 + $0x10] sm:$0xff]
      %v321 = vld [vmem:[%s3 + $0x18] sm:$0xff]
      %v322 = vld [vmem:[%s3 + $0x20] sm:$0xff]
      %v323 = vld [vmem:[%s3 + $0x28] sm:$0xff]
      %v324 = vld [vmem:[%s3 + $0x30] sm:$0xff]
      %v325 = vld [vmem:[%s3 + $0x38] sm:$0xff]
      %v326 = vld [vmem:[%s3 + $0x40] sm:$0xff]
      %v327 = vld [vmem:[%s3 + $0x48] sm:$0xff]
      %v328 = vld [vmem:[%s3 + $0x50] sm:$0xff]
      %v329 = vld [vmem:[%s3 + $0x58] sm:$0xff]
      %v330 = vld [vmem:[%s3 + $0x60] sm:$0xff]
      %v331 = vld [vmem:[%s3 + $0x68] sm:$0xff]
      %v332 = vld [vmem:[%s3 + $0x70] sm:$0xff]
      %v333 = vld [vmem:[%s3 + $0x78] sm:$0xff]
      %v334 = vld [vmem:[%s3 + $0x80] sm:$0xff]
      %v335 = vld [vmem:[%s3 + $0x88] sm:$0xff]
      %v336 = vld [vmem:[%s3 + $0x90] sm:$0xff]
      %v337 = vld [vmem:[%s3 + $0x98] sm:$0xff]
      %v338 = vld [vmem:[%s3 + $0xa0] sm:$0xff]
      %v339 = vld [vmem:[%s3 + $0xa8] sm:$0xff]
      %v340 = vld [vmem:[%s3 + $0xb0] sm:$0xff]
      %v341 = vld [vmem:[%s3 + $0xb8] sm:$0xff]
      %v342 = vld [vmem:[%s3 + $0xc0] sm:$0xff]
      %v343 = vld [vmem:[%s3 + $0xc8] sm:$0xff]
      %v344 = vld [vmem:[%s3 + $0xd0] sm:$0xff]
      %v345 = vld [vmem:[%s3 + $0xd8] sm:$0xff]
      %v346 = vld [vmem:[%s3 + $0xe0] sm:$0xff]
      %v347 = vld [vmem:[%s3 + $0xe8] sm:$0xff]
      %v348 = vld [vmem:[%s3 + $0xf0] sm:$0xff]
      %v349 = vld [vmem:[%s3 + $0xf8] sm:$0xff]
      %v350 = vld [vmem:[%s3 + $0x100] sm:$0xff]
      %v351 = vld [vmem:[%s3 + $0x108] sm:$0xff]
      %v352 = vld [vmem:[%s3 + $0x110] sm:$0xff]
      %v353 = vld [vmem:[%s3 + $0x118] sm:$0xff]
      %v354 = vld [vmem:[%s3 + $0x120] sm:$0xff]
      %v355 = vld [vmem:[%s3 + $0x128] sm:$0xff]
      %v356 = vld [vmem:[%s3 + $0x130] sm:$0xff]
      %v357 = vld [vmem:[%s3 + $0x138] sm:$0xff]
      %v358 = vld [vmem:[%s3 + $0x140] sm:$0xff]
      %v359 = vld [vmem:[%s3 + $0x148] sm:$0xff]
      %v360 = vld [vmem:[%s3 + $0x150] sm:$0xff]
      %v361 = vld [vmem:[%s3 + $0x158] sm:$0xff]
      %v362 = vld [vmem:[%s3 + $0x160] sm:$0xff]
      %v363 = vld [vmem:[%s3 + $0x168] sm:$0xff]
      %v364 = vld [vmem:[%s3 + $0x170] sm:$0xff]
      %v365 = vld [vmem:[%s3 + $0x178] sm:$0xff]
      %v366 = vld [vmem:[%s4] sm:$0x7]
      %v367 = vld [vmem:[%s5] sm:$0xff]
      %v368 = vld [vmem:[%s5 + $0x8] sm:$0xff]
      %v369 = vld [vmem:[%s5 + $0x10] sm:$0xff]
      %v370 = vld [vmem:[%s5 + $0x18] sm:$0xff]
      %v371 = vld [vmem:[%s5 + $0x20] sm:$0xff]
      %v372 = vld [vmem:[%s5 + $0x28] sm:$0xff]
      %v373 = vld [vmem:[%s5 + $0x30] sm:$0xff]
      %v374 = vld [vmem:[%s5 + $0x38] sm:$0xff]
      %v375 = vld [vmem:[%s5 + $0x40] sm:$0xff]
      %v376 = vld [vmem:[%s5 + $0x48] sm:$0xff]
      %v377 = vld [vmem:[%s5 + $0x50] sm:$0xff]
      %v378 = vld [vmem:[%s5 + $0x58] sm:$0xff]
      %v379 = vld [vmem:[%s5 + $0x60] sm:$0xff]
      %v380 = vld [vmem:[%s5 + $0x68] sm:$0xff]
      %v381 = vld [vmem:[%s5 + $0x70] sm:$0xff]
      %v382 = vld [vmem:[%s5 + $0x78] sm:$0xff]
      %v383 = vld [vmem:[%s6] sm:$0x1]
      %v384 = vld [vmem:[%s290] sm:$0xf]
      %p385 = scmp.lt.s32.totalorder %s316, %s317
      // Predicated region
      $region49: #{_encoder_impl.3} parent=43 // pred_check
        %p386 = pneg %p385
      $region50: #{_encoder_impl.3} parent=43 // pred_check_branch
        %388 = sbr.rel (%p386) target = $region52
      $region51: #{_encoder_impl.3} parent=43 // pred_region
        %v389 = vld [vmem:[#allocation2] sm:$0xf]
        %v390 = vld [vmem:[%s300] sm:$0xff]
        %v391 = vld [vmem:[%s300 + $0x8] sm:$0xf]
        %v393 = vlaneseq
        %v394 = vshrl.u32 %v393, 7
        %v395 = vsub.s32 0, %v394
        %v396 = vrot.slane %v366, %v395
        %v397 = vlaneseq
        %v398 = vshrl.u32 %v397, 7
        %v399 = vsub.s32 1, %v398
        %v400 = vrot.slane %v366, %v399
        %v401 = vlaneseq
        %v402 = vshrl.u32 %v401, 7
        %v403 = vsub.s32 2, %v402
        %v404 = vrot.slane %v366, %v403
        %408 = vmatprep.subr.mxu0 %v319
        %409 = vmatpush1.msra.mxu0 %v318
        %410 = vmatprep.subr.mxu0 %v322
        %411 = vmatpush1.msra.mxu0 %v321
        %412 = vmatprep.subr.mxu0 %v325
        %413 = vmatpush1.msra.mxu0 %v324
        %414 = vmatprep.subr.mxu0 %v328
        %415 = vmatpush1.msra.mxu0 %v327
        %416 = vmatprep.subr.mxu0 %v331
        %417 = vmatpush1.msra.mxu0 %v330
        %418 = vmatprep.subr.mxu0 %v334
        %419 = vmatpush1.msra.mxu0 %v333
        %420 = vmatprep.subr.mxu0 %v337
        %421 = vmatpush1.msra.mxu0 %v336
        %422 = vmatprep.subr.mxu0 %v340
        %423 = vmatpush1.msra.mxu0 %v339
        %424 = vmatprep.subr.mxu0 %v343
        %425 = vmatpush1.msra.mxu0 %v342
        %426 = vmatprep.subr.mxu0 %v346
        %427 = vmatpush1.msra.mxu0 %v345
        %428 = vmatprep.subr.mxu0 %v349
        %429 = vmatpush1.msra.mxu0 %v348
        %430 = vmatprep.subr.mxu0 %v352
        %431 = vmatpush1.msra.mxu0 %v351
        %432 = vmatprep.subr.mxu0 %v355
        %433 = vmatpush1.msra.mxu0 %v354
        %434 = vmatprep.subr.mxu0 %v358
        %435 = vmatpush1.msra.mxu0 %v357
        %436 = vmatprep.subr.mxu0 %v361
        %437 = vmatpush1.msra.mxu0 %v360
        %438 = vmatprep.subr.mxu0 %v364
        %439 = vmatpush1.msra.mxu0 %v363
        %440 = vmatprep.subr.mxu0 0.0
        %441 = vmatpush1.msra.mxu0 0.0
        %442 = vmatprep.subr.mxu0 0.0
        %443 = vmatpush1.msra.mxu0 0.0
        %444 = vmatprep.subr.mxu0 0.0
        %445 = vmatpush1.msra.mxu0 0.0
        %446 = vmatprep.subr.mxu0 0.0
        %447 = vmatpush1.msra.mxu0 0.0
        %448 = vmatprep.subr.mxu0 0.0
        %449 = vmatpush1.msra.mxu0 0.0
        %450 = vmatprep.subr.mxu0 0.0
        %451 = vmatpush1.msra.mxu0 0.0
        %452 = vmatprep.subr.mxu0 0.0
        %453 = vmatpush1.msra.mxu0 0.0
        %454 = vmatprep.subr.mxu0 0.0
        %455 = vmatpush1.msra.mxu0 0.0
        %456 = vmatprep.subr.mxu0 0.0
        %457 = vmatpush1.msra.mxu0 0.0
        %458 = vmatprep.subr.mxu0 0.0
        %459 = vmatpush1.msra.mxu0 0.0
        %460 = vmatprep.subr.mxu0 0.0
        %461 = vmatpush1.msra.mxu0 0.0
        %462 = vmatprep.subr.mxu0 0.0
        %463 = vmatpush1.msra.mxu0 0.0
        %464 = vmatprep.subr.mxu0 0.0
        %465 = vmatpush1.msra.mxu0 0.0
        %466 = vmatprep.subr.mxu0 0.0
        %467 = vmatpush1.msra.mxu0 0.0
        %468 = vmatprep.subr.mxu0 0.0
        %469 = vmatpush1.msra.mxu0 0.0
        %470 = vmatprep.subr.mxu0 0.0
        %471 = vmatpush1.msra.mxu0 0.0
        %472 = vmatprep.mubr.f32.mxu0 0.0
        %473 = vmatmul.mubr.f32.gmra.mrb[0].mxu0 %v389
        %v474 = vpop.f32.mrb[0].mxu0
        %v475 = vadd.f32 %v396, %v474
        %v476 = vpop.f32.mrb[0].mxu0
        %v477 = vadd.f32 %v400, %v476
        %478 = vdwg.mxu0
        %479 = vmatprep.subr.mxu0 0.0
        %480 = vmatpush1.msra.mxu0 %v320
        %481 = vmatprep.subr.mxu0 0.0
        %482 = vmatpush1.msra.mxu0 %v323
        %483 = vmatprep.subr.mxu0 0.0
        %484 = vmatpush1.msra.mxu0 %v326
        %485 = vmatprep.subr.mxu0 0.0
        %486 = vmatpush1.msra.mxu0 %v329
        %487 = vmatprep.subr.mxu0 0.0
        %488 = vmatpush1.msra.mxu0 %v332
        %489 = vmatprep.subr.mxu0 0.0
        %490 = vmatpush1.msra.mxu0 %v335
        %491 = vmatprep.subr.mxu0 0.0
        %492 = vmatpush1.msra.mxu0 %v338
        %493 = vmatprep.subr.mxu0 0.0
        %494 = vmatpush1.msra.mxu0 %v341
        %495 = vmatprep.subr.mxu0 0.0
        %496 = vmatpush1.msra.mxu0 %v344
        %497 = vmatprep.subr.mxu0 0.0
        %498 = vmatpush1.msra.mxu0 %v347
        %499 = vmatprep.subr.mxu0 0.0
        %500 = vmatpush1.msra.mxu0 %v350
        %501 = vmatprep.subr.mxu0 0.0
        %502 = vmatpush1.msra.mxu0 %v353
        %503 = vmatprep.subr.mxu0 0.0
        %504 = vmatpush1.msra.mxu0 %v356
        %505 = vmatprep.subr.mxu0 0.0
        %506 = vmatpush1.msra.mxu0 %v359
        %507 = vmatprep.subr.mxu0 0.0
        %508 = vmatpush1.msra.mxu0 %v362
        %509 = vmatprep.subr.mxu0 0.0
        %510 = vmatpush1.msra.mxu0 %v365
        %511 = vmatprep.subr.mxu0 0.0
        %512 = vmatpush1.msra.mxu0 0.0
        %513 = vmatprep.subr.mxu0 0.0
        %514 = vmatpush1.msra.mxu0 0.0
        %515 = vmatprep.subr.mxu0 0.0
        %516 = vmatpush1.msra.mxu0 0.0
        %517 = vmatprep.subr.mxu0 0.0
        %518 = vmatpush1.msra.mxu0 0.0
        %519 = vmatprep.subr.mxu0 0.0
        %520 = vmatpush1.msra.mxu0 0.0
        %521 = vmatprep.subr.mxu0 0.0
        %522 = vmatpush1.msra.mxu0 0.0
        %523 = vmatprep.subr.mxu0 0.0
        %524 = vmatpush1.msra.mxu0 0.0
        %525 = vmatprep.subr.mxu0 0.0
        %526 = vmatpush1.msra.mxu0 0.0
        %527 = vmatprep.subr.mxu0 0.0
        %528 = vmatpush1.msra.mxu0 0.0
        %529 = vmatprep.subr.mxu0 0.0
        %530 = vmatpush1.msra.mxu0 0.0
        %531 = vmatprep.subr.mxu0 0.0
        %532 = vmatpush1.msra.mxu0 0.0
        %533 = vmatprep.subr.mxu0 0.0
        %534 = vmatpush1.msra.mxu0 0.0
        %535 = vmatprep.subr.mxu0 0.0
        %536 = vmatpush1.msra.mxu0 0.0
        %537 = vmatprep.subr.mxu0 0.0
        %538 = vmatpush1.msra.mxu0 0.0
        %539 = vmatprep.subr.mxu0 0.0
        %540 = vmatpush1.msra.mxu0 0.0
        %541 = vmatprep.subr.mxu0 0.0
        %542 = vmatpush1.msra.mxu0 0.0
        %543 = vmatprep.mubr.f32.mxu0 0.0
        %544 = vmatmul.mubr.f32.gmra.mrb[0].mxu0 %v389
        %v545 = vpop.f32.mrb[0].mxu0
        %v546 = vadd.f32 %v404, %v545
        %v547 = vpop.f32.mrb[0].mxu0
        %548 = vdwg.mxu0
        %v549 = vadd.f32 %v390, %v475
        %v550 = vxor.u32 %v549, 2147483648
        %v551 = vmul.f32 %v550, 1.442695
        %v552 = vpow.pop %v551
        %v553 = vadd.f32 %v552, 1.0
        %v554 = vrcp.pop %v553
        %v555 = vmul.f32 1.0, %v554
        %v557 = vrot.slane %v390, 4
        %v559 = vadd.f32 %v557, %v477
        %v560 = vxor.u32 %v559, 2147483648
        %v561 = vmul.f32 %v560, 1.442695
        %v562 = vpow.pop %v561
        %v563 = vadd.f32 %v562, 1.0
        %v564 = vrcp.pop %v563
        %v565 = vmul.f32 1.0, %v564
        %v566 = vmul.f32 %v555, %v546
        %v567 = vadd.f32 %v391, %v566
        %v568 = vtanh.pop %v567
        %v569 = vsub.f32 1.0, %v565
        %v570 = vmul.f32 %v569, %v568
        %v571 = vmul.f32 %v565, %v389
        %v572 = vadd.f32 %v570, %v571
        %v573 = vstv %s316
        %vm574 = vcmp.lt.s32.totalorder %v573, %v384
        %v575 = vsel %vm574, 1, 0
        %576 = vset.pattern.permute.xlu0 0
        %577 = vperm.xlu0 %576, %v575
        %v578 = vpop.permute.xlu0 %577
        %vm579 = vcmp.eq.s32.totalorder %v578, 1
        %v580 = vsel %vm579, %v572, %v389
        %581 = vst [vmem:[#allocation2] sm:$0xf] %v580
        %v582 = vsel %vm579, %v572, 0.0
        %v584 = vlaneseq
        %v585 = vshrl.u32 %v584, 7
        %v586 = vsub.s32 0, %v585
        %v587 = vrot.slane %v383, %v586
        %589 = vmatprep.subr.mxu0 0.0
        %590 = vmatpush1.msra.mxu0 %v367
        %591 = vmatprep.subr.mxu0 0.0
        %592 = vmatpush1.msra.mxu0 %v368
        %593 = vmatprep.subr.mxu0 0.0
        %594 = vmatpush1.msra.mxu0 %v369
        %595 = vmatprep.subr.mxu0 0.0
        %596 = vmatpush1.msra.mxu0 %v370
        %597 = vmatprep.subr.mxu0 0.0
        %598 = vmatpush1.msra.mxu0 %v371
        %599 = vmatprep.subr.mxu0 0.0
        %600 = vmatpush1.msra.mxu0 %v372
        %601 = vmatprep.subr.mxu0 0.0
        %602 = vmatpush1.msra.mxu0 %v373
        %603 = vmatprep.subr.mxu0 0.0
        %604 = vmatpush1.msra.mxu0 %v374
        %605 = vmatprep.subr.mxu0 0.0
        %606 = vmatpush1.msra.mxu0 %v375
        %607 = vmatprep.subr.mxu0 0.0
        %608 = vmatpush1.msra.mxu0 %v376
        %609 = vmatprep.subr.mxu0 0.0
        %610 = vmatpush1.msra.mxu0 %v377
        %611 = vmatprep.subr.mxu0 0.0
        %612 = vmatpush1.msra.mxu0 %v378
        %613 = vmatprep.subr.mxu0 0.0
        %614 = vmatpush1.msra.mxu0 %v379
        %615 = vmatprep.subr.mxu0 0.0
        %616 = vmatpush1.msra.mxu0 %v380
        %617 = vmatprep.subr.mxu0 0.0
        %618 = vmatpush1.msra.mxu0 %v381
        %619 = vmatprep.subr.mxu0 0.0
        %620 = vmatpush1.msra.mxu0 %v382
        %621 = vmatprep.subr.mxu0 0.0
        %622 = vmatpush1.msra.mxu0 0.0
        %623 = vmatprep.subr.mxu0 0.0
        %624 = vmatpush1.msra.mxu0 0.0
        %625 = vmatprep.subr.mxu0 0.0
        %626 = vmatpush1.msra.mxu0 0.0
        %627 = vmatprep.subr.mxu0 0.0
        %628 = vmatpush1.msra.mxu0 0.0
        %629 = vmatprep.subr.mxu0 0.0
        %630 = vmatpush1.msra.mxu0 0.0
        %631 = vmatprep.subr.mxu0 0.0
        %632 = vmatpush1.msra.mxu0 0.0
        %633 = vmatprep.subr.mxu0 0.0
        %634 = vmatpush1.msra.mxu0 0.0
        %635 = vmatprep.subr.mxu0 0.0
        %636 = vmatpush1.msra.mxu0 0.0
        %637 = vmatprep.subr.mxu0 0.0
        %638 = vmatpush1.msra.mxu0 0.0
        %639 = vmatprep.subr.mxu0 0.0
        %640 = vmatpush1.msra.mxu0 0.0
        %641 = vmatprep.subr.mxu0 0.0
        %642 = vmatpush1.msra.mxu0 0.0
        %643 = vmatprep.subr.mxu0 0.0
        %644 = vmatpush1.msra.mxu0 0.0
        %645 = vmatprep.subr.mxu0 0.0
        %646 = vmatpush1.msra.mxu0 0.0
        %647 = vmatprep.subr.mxu0 0.0
        %648 = vmatpush1.msra.mxu0 0.0
        %649 = vmatprep.subr.mxu0 0.0
        %650 = vmatpush1.msra.mxu0 0.0
        %651 = vmatprep.subr.mxu0 0.0
        %652 = vmatpush1.msra.mxu0 0.0
        %653 = vmatprep.mubr.f32.mxu0 0.0
        %654 = vmatmul.mubr.f32.gmra.mrb[0].mxu0 %v582
        %v655 = vpop.f32.mrb[0].mxu0
        %v656 = vadd.f32 %v587, %v655
        %v657 = vpop.f32.mrb[0].mxu0
        %658 = vdwg.mxu0
        %659 = vst [vmem:[%s309] sm:$0xf] %v656
        %s660 = sadd.s32 %s316, 1
        %v661 = vld [vmem:[#allocation2] sm:$0xf]
        %s662 = scalar_lea.vmem %s300, 12
        %v663 = vld [vmem:[%s662] sm:$0xff]
        %v664 = vld [vmem:[%s662 + $0x8] sm:$0xf]
        %665 = vmatprep.subr.mxu0 %v319
        %666 = vmatpush1.msra.mxu0 %v318
        %667 = vmatprep.subr.mxu0 %v322
        %668 = vmatpush1.msra.mxu0 %v321
        %669 = vmatprep.subr.mxu0 %v325
        %670 = vmatpush1.msra.mxu0 %v324
        %671 = vmatprep.subr.mxu0 %v328
        %672 = vmatpush1.msra.mxu0 %v327
        %673 = vmatprep.subr.mxu0 %v331
        %674 = vmatpush1.msra.mxu0 %v330
        %675 = vmatprep.subr.mxu0 %v334
        %676 = vmatpush1.msra.mxu0 %v333
        %677 = vmatprep.subr.mxu0 %v337
        %678 = vmatpush1.msra.mxu0 %v336
        %679 = vmatprep.subr.mxu0 %v340
        %680 = vmatpush1.msra.mxu0 %v339
        %681 = vmatprep.subr.mxu0 %v343
        %682 = vmatpush1.msra.mxu0 %v342
        %683 = vmatprep.subr.mxu0 %v346
        %684 = vmatpush1.msra.mxu0 %v345
        %685 = vmatprep.subr.mxu0 %v349
        %686 = vmatpush1.msra.mxu0 %v348
        %687 = vmatprep.subr.mxu0 %v352
        %688 = vmatpush1.msra.mxu0 %v351
        %689 = vmatprep.subr.mxu0 %v355
        %690 = vmatpush1.msra.mxu0 %v354
        %691 = vmatprep.subr.mxu0 %v358
        %692 = vmatpush1.msra.mxu0 %v357
        %693 = vmatprep.subr.mxu0 %v361
        %694 = vmatpush1.msra.mxu0 %v360
        %695 = vmatprep.subr.mxu0 %v364
        %696 = vmatpush1.msra.mxu0 %v363
        %697 = vmatprep.subr.mxu0 0.0
        %698 = vmatpush1.msra.mxu0 0.0
        %699 = vmatprep.subr.mxu0 0.0
        %700 = vmatpush1.msra.mxu0 0.0
        %701 = vmatprep.subr.mxu0 0.0
        %702 = vmatpush1.msra.mxu0 0.0
        %703 = vmatprep.subr.mxu0 0.0
        %704 = vmatpush1.msra.mxu0 0.0
        %705 = vmatprep.subr.mxu0 0.0
        %706 = vmatpush1.msra.mxu0 0.0
        %707 = vmatprep.subr.mxu0 0.0
        %708 = vmatpush1.msra.mxu0 0.0
        %709 = vmatprep.subr.mxu0 0.0
        %710 = vmatpush1.msra.mxu0 0.0
        %711 = vmatprep.subr.mxu0 0.0
        %712 = vmatpush1.msra.mxu0 0.0
        %713 = vmatprep.subr.mxu0 0.0
        %714 = vmatpush1.msra.mxu0 0.0
        %715 = vmatprep.subr.mxu0 0.0
        %716 = vmatpush1.msra.mxu0 0.0
        %717 = vmatprep.subr.mxu0 0.0
        %718 = vmatpush1.msra.mxu0 0.0
        %719 = vmatprep.subr.mxu0 0.0
        %720 = vmatpush1.msra.mxu0 0.0
        %721 = vmatprep.subr.mxu0 0.0
        %722 = vmatpush1.msra.mxu0 0.0
        %723 = vmatprep.subr.mxu0 0.0
        %724 = vmatpush1.msra.mxu0 0.0
        %725 = vmatprep.subr.mxu0 0.0
        %726 = vmatpush1.msra.mxu0 0.0
        %727 = vmatprep.subr.mxu0 0.0
        %728 = vmatpush1.msra.mxu0 0.0
        %729 = vmatprep.mubr.f32.mxu0 0.0
        %730 = vmatmul.mubr.f32.gmra.mrb[0].mxu0 %v661
        %v731 = vpop.f32.mrb[0].mxu0
        %v732 = vadd.f32 %v396, %v731
        %v733 = vpop.f32.mrb[0].mxu0
        %v734 = vadd.f32 %v400, %v733
        %735 = vdwg.mxu0
        %736 = vmatprep.subr.mxu0 0.0
        %737 = vmatpush1.msra.mxu0 %v320
        %738 = vmatprep.subr.mxu0 0.0
        %739 = vmatpush1.msra.mxu0 %v323
        %740 = vmatprep.subr.mxu0 0.0
        %741 = vmatpush1.msra.mxu0 %v326
        %742 = vmatprep.subr.mxu0 0.0
        %743 = vmatpush1.msra.mxu0 %v329
        %744 = vmatprep.subr.mxu0 0.0
        %745 = vmatpush1.msra.mxu0 %v332
        %746 = vmatprep.subr.mxu0 0.0
        %747 = vmatpush1.msra.mxu0 %v335
        %748 = vmatprep.subr.mxu0 0.0
        %749 = vmatpush1.msra.mxu0 %v338
        %750 = vmatprep.subr.mxu0 0.0
        %751 = vmatpush1.msra.mxu0 %v341
        %752 = vmatprep.subr.mxu0 0.0
        %753 = vmatpush1.msra.mxu0 %v344
        %754 = vmatprep.subr.mxu0 0.0
        %755 = vmatpush1.msra.mxu0 %v347
        %756 = vmatprep.subr.mxu0 0.0
        %757 = vmatpush1.msra.mxu0 %v350
        %758 = vmatprep.subr.mxu0 0.0
        %759 = vmatpush1.msra.mxu0 %v353
        %760 = vmatprep.subr.mxu0 0.0
        %761 = vmatpush1.msra.mxu0 %v356
        %762 = vmatprep.subr.mxu0 0.0
        %763 = vmatpush1.msra.mxu0 %v359
        %764 = vmatprep.subr.mxu0 0.0
        %765 = vmatpush1.msra.mxu0 %v362
        %766 = vmatprep.subr.mxu0 0.0
        %767 = vmatpush1.msra.mxu0 %v365
        %768 = vmatprep.subr.mxu0 0.0
        %769 = vmatpush1.msra.mxu0 0.0
        %770 = vmatprep.subr.mxu0 0.0
        %771 = vmatpush1.msra.mxu0 0.0
        %772 = vmatprep.subr.mxu0 0.0
        %773 = vmatpush1.msra.mxu0 0.0
        %774 = vmatprep.subr.mxu0 0.0
        %775 = vmatpush1.msra.mxu0 0.0
        %776 = vmatprep.subr.mxu0 0.0
        %777 = vmatpush1.msra.mxu0 0.0
        %778 = vmatprep.subr.mxu0 0.0
        %779 = vmatpush1.msra.mxu0 0.0
        %780 = vmatprep.subr.mxu0 0.0
        %781 = vmatpush1.msra.mxu0 0.0
        %782 = vmatprep.subr.mxu0 0.0
        %783 = vmatpush1.msra.mxu0 0.0
        %784 = vmatprep.subr.mxu0 0.0
        %785 = vmatpush1.msra.mxu0 0.0
        %786 = vmatprep.subr.mxu0 0.0
        %787 = vmatpush1.msra.mxu0 0.0
        %788 = vmatprep.subr.mxu0 0.0
        %789 = vmatpush1.msra.mxu0 0.0
        %790 = vmatprep.subr.mxu0 0.0
        %791 = vmatpush1.msra.mxu0 0.0
        %792 = vmatprep.subr.mxu0 0.0
        %793 = vmatpush1.msra.mxu0 0.0
        %794 = vmatprep.subr.mxu0 0.0
        %795 = vmatpush1.msra.mxu0 0.0
        %796 = vmatprep.subr.mxu0 0.0
        %797 = vmatpush1.msra.mxu0 0.0
        %798 = vmatprep.subr.mxu0 0.0
        %799 = vmatpush1.msra.mxu0 0.0
        %800 = vmatprep.mubr.f32.mxu0 0.0
        %801 = vmatmul.mubr.f32.gmra.mrb[0].mxu0 %v661
        %v802 = vpop.f32.mrb[0].mxu0
        %v803 = vadd.f32 %v404, %v802
        %v804 = vpop.f32.mrb[0].mxu0
        %805 = vdwg.mxu0
        %v806 = vadd.f32 %v663, %v732
        %v807 = vxor.u32 %v806, 2147483648
        %v808 = vmul.f32 %v807, 1.442695
        %v809 = vpow.pop %v808
        %v810 = vadd.f32 %v809, 1.0
        %v811 = vrcp.pop %v810
        %v812 = vmul.f32 1.0, %v811
        %v814 = vrot.slane %v663, 4
        %v816 = vadd.f32 %v814, %v734
        %v817 = vxor.u32 %v816, 2147483648
        %v818 = vmul.f32 %v817, 1.442695
        %v819 = vpow.pop %v818
        %v820 = vadd.f32 %v819, 1.0
        %v821 = vrcp.pop %v820
        %v822 = vmul.f32 1.0, %v821
        %v823 = vmul.f32 %v812, %v803
        %v824 = vadd.f32 %v664, %v823
        %v825 = vtanh.pop %v824
        %v826 = vsub.f32 1.0, %v822
        %v827 = vmul.f32 %v826, %v825
        %v828 = vmul.f32 %v822, %v661
        %v829 = vadd.f32 %v827, %v828
        %v830 = vstv %s660
        %vm831 = vcmp.lt.s32.totalorder %v830, %v384
        %v832 = vsel %vm831, 1, 0
        %833 = vset.pattern.permute.xlu0 0
        %834 = vperm.xlu0 %833, %v832
        %v835 = vpop.permute.xlu0 %834
        %vm836 = vcmp.eq.s32.totalorder %v835, 1
        %v837 = vsel %vm836, %v829, %v661
        %838 = vst [vmem:[#allocation2] sm:$0xf] %v837
        %v839 = vsel %vm836, %v829, 0.0
        %840 = vmatprep.subr.mxu0 0.0
        %841 = vmatpush1.msra.mxu0 %v367
        %842 = vmatprep.subr.mxu0 0.0
        %843 = vmatpush1.msra.mxu0 %v368
        %844 = vmatprep.subr.mxu0 0.0
        %845 = vmatpush1.msra.mxu0 %v369
        %846 = vmatprep.subr.mxu0 0.0
        %847 = vmatpush1.msra.mxu0 %v370
        %848 = vmatprep.subr.mxu0 0.0
        %849 = vmatpush1.msra.mxu0 %v371
        %850 = vmatprep.subr.mxu0 0.0
        %851 = vmatpush1.msra.mxu0 %v372
        %852 = vmatprep.subr.mxu0 0.0
        %853 = vmatpush1.msra.mxu0 %v373
        %854 = vmatprep.subr.mxu0 0.0
        %855 = vmatpush1.msra.mxu0 %v374
        %856 = vmatprep.subr.mxu0 0.0
        %857 = vmatpush1.msra.mxu0 %v375
        %858 = vmatprep.subr.mxu0 0.0
        %859 = vmatpush1.msra.mxu0 %v376
        %860 = vmatprep.subr.mxu0 0.0
        %861 = vmatpush1.msra.mxu0 %v377
        %862 = vmatprep.subr.mxu0 0.0
        %863 = vmatpush1.msra.mxu0 %v378
        %864 = vmatprep.subr.mxu0 0.0
        %865 = vmatpush1.msra.mxu0 %v379
        %866 = vmatprep.subr.mxu0 0.0
        %867 = vmatpush1.msra.mxu0 %v380
        %868 = vmatprep.subr.mxu0 0.0
        %869 = vmatpush1.msra.mxu0 %v381
        %870 = vmatprep.subr.mxu0 0.0
        %871 = vmatpush1.msra.mxu0 %v382
        %872 = vmatprep.subr.mxu0 0.0
        %873 = vmatpush1.msra.mxu0 0.0
        %874 = vmatprep.subr.mxu0 0.0
        %875 = vmatpush1.msra.mxu0 0.0
        %876 = vmatprep.subr.mxu0 0.0
        %877 = vmatpush1.msra.mxu0 0.0
        %878 = vmatprep.subr.mxu0 0.0
        %879 = vmatpush1.msra.mxu0 0.0
        %880 = vmatprep.subr.mxu0 0.0
        %881 = vmatpush1.msra.mxu0 0.0
        %882 = vmatprep.subr.mxu0 0.0
        %883 = vmatpush1.msra.mxu0 0.0
        %884 = vmatprep.subr.mxu0 0.0
        %885 = vmatpush1.msra.mxu0 0.0
        %886 = vmatprep.subr.mxu0 0.0
        %887 = vmatpush1.msra.mxu0 0.0
        %888 = vmatprep.subr.mxu0 0.0
        %889 = vmatpush1.msra.mxu0 0.0
        %890 = vmatprep.subr.mxu0 0.0
        %891 = vmatpush1.msra.mxu0 0.0
        %892 = vmatprep.subr.mxu0 0.0
        %893 = vmatpush1.msra.mxu0 0.0
        %894 = vmatprep.subr.mxu0 0.0
        %895 = vmatpush1.msra.mxu0 0.0
        %896 = vmatprep.subr.mxu0 0.0
        %897 = vmatpush1.msra.mxu0 0.0
        %898 = vmatprep.subr.mxu0 0.0
        %899 = vmatpush1.msra.mxu0 0.0
        %900 = vmatprep.subr.mxu0 0.0
        %901 = vmatpush1.msra.mxu0 0.0
        %902 = vmatprep.subr.mxu0 0.0
        %903 = vmatpush1.msra.mxu0 0.0
        %904 = vmatprep.mubr.f32.mxu0 0.0
        %905 = vmatmul.mubr.f32.gmra.mrb[0].mxu0 %v839
        %v906 = vpop.f32.mrb[0].mxu0
        %v907 = vadd.f32 %v587, %v906
        %v908 = vpop.f32.mrb[0].mxu0
        %909 = vdwg.mxu0
        %s910 = scalar_lea.vmem %s309, 4
        %911 = vst [vmem:[%s910] sm:$0xf] %v907
        %s912 = sadd.s32 %s316, 2
        %v913 = vld [vmem:[#allocation2] sm:$0xf]
        %s914 = scalar_lea.vmem %s300, 24
        %v915 = vld [vmem:[%s914] sm:$0xff]
        %v916 = vld [vmem:[%s914 + $0x8] sm:$0xf]
        %917 = vmatprep.subr.mxu0 %v319
        %918 = vmatpush1.msra.mxu0 %v318
        %919 = vmatprep.subr.mxu0 %v322
        %920 = vmatpush1.msra.mxu0 %v321
        %921 = vmatprep.subr.mxu0 %v325
        %922 = vmatpush1.msra.mxu0 %v324
        %923 = vmatprep.subr.mxu0 %v328
        %924 = vmatpush1.msra.mxu0 %v327
        %925 = vmatprep.subr.mxu0 %v331
        %926 = vmatpush1.msra.mxu0 %v330
        %927 = vmatprep.subr.mxu0 %v334
        %928 = vmatpush1.msra.mxu0 %v333
        %929 = vmatprep.subr.mxu0 %v337
        %930 = vmatpush1.msra.mxu0 %v336
        %931 = vmatprep.subr.mxu0 %v340
        %932 = vmatpush1.msra.mxu0 %v339
        %933 = vmatprep.subr.mxu0 %v343
        %934 = vmatpush1.msra.mxu0 %v342
        %935 = vmatprep.subr.mxu0 %v346
        %936 = vmatpush1.msra.mxu0 %v345
        %937 = vmatprep.subr.mxu0 %v349
        %938 = vmatpush1.msra.mxu0 %v348
        %939 = vmatprep.subr.mxu0 %v352
        %940 = vmatpush1.msra.mxu0 %v351
        %941 = vmatprep.subr.mxu0 %v355
        %942 = vmatpush1.msra.mxu0 %v354
        %943 = vmatprep.subr.mxu0 %v358
        %944 = vmatpush1.msra.mxu0 %v357
        %945 = vmatprep.subr.mxu0 %v361
        %946 = vmatpush1.msra.mxu0 %v360
        %947 = vmatprep.subr.mxu0 %v364
        %948 = vmatpush1.msra.mxu0 %v363
        %949 = vmatprep.subr.mxu0 0.0
        %950 = vmatpush1.msra.mxu0 0.0
        %951 = vmatprep.subr.mxu0 0.0
        %952 = vmatpush1.msra.mxu0 0.0
        %953 = vmatprep.subr.mxu0 0.0
        %954 = vmatpush1.msra.mxu0 0.0
        %955 = vmatprep.subr.mxu0 0.0
        %956 = vmatpush1.msra.mxu0 0.0
        %957 = vmatprep.subr.mxu0 0.0
        %958 = vmatpush1.msra.mxu0 0.0
        %959 = vmatprep.subr.mxu0 0.0
        %960 = vmatpush1.msra.mxu0 0.0
        %961 = vmatprep.subr.mxu0 0.0
        %962 = vmatpush1.msra.mxu0 0.0
        %963 = vmatprep.subr.mxu0 0.0
        %964 = vmatpush1.msra.mxu0 0.0
        %965 = vmatprep.subr.mxu0 0.0
        %966 = vmatpush1.msra.mxu0 0.0
        %967 = vmatprep.subr.mxu0 0.0
        %968 = vmatpush1.msra.mxu0 0.0
        %969 = vmatprep.subr.mxu0 0.0
        %970 = vmatpush1.msra.mxu0 0.0
        %971 = vmatprep.subr.mxu0 0.0
        %972 = vmatpush1.msra.mxu0 0.0
        %973 = vmatprep.subr.mxu0 0.0
        %974 = vmatpush1.msra.mxu0 0.0
        %975 = vmatprep.subr.mxu0 0.0
        %976 = vmatpush1.msra.mxu0 0.0
        %977 = vmatprep.subr.mxu0 0.0
        %978 = vmatpush1.msra.mxu0 0.0
        %979 = vmatprep.subr.mxu0 0.0
        %980 = vmatpush1.msra.mxu0 0.0
        %981 = vmatprep.mubr.f32.mxu0 0.0
        %982 = vmatmul.mubr.f32.gmra.mrb[0].mxu0 %v913
        %v983 = vpop.f32.mrb[0].mxu0
        %v984 = vadd.f32 %v396, %v983
        %v985 = vpop.f32.mrb[0].mxu0
        %v986 = vadd.f32 %v400, %v985
        %987 = vdwg.mxu0
        %988 = vmatprep.subr.mxu0 0.0
        %989 = vmatpush1.msra.mxu0 %v320
        %990 = vmatprep.subr.mxu0 0.0
        %991 = vmatpush1.msra.mxu0 %v323
        %992 = vmatprep.subr.mxu0 0.0
        %993 = vmatpush1.msra.mxu0 %v326
        %994 = vmatprep.subr.mxu0 0.0
        %995 = vmatpush1.msra.mxu0 %v329
        %996 = vmatprep.subr.mxu0 0.0
        %997 = vmatpush1.msra.mxu0 %v332
        %998 = vmatprep.subr.mxu0 0.0
        %999 = vmatpush1.msra.mxu0 %v335
        %1000 = vmatprep.subr.mxu0 0.0
        %1001 = vmatpush1.msra.mxu0 %v338
        %1002 = vmatprep.subr.mxu0 0.0
        %1003 = vmatpush1.msra.mxu0 %v341
        %1004 = vmatprep.subr.mxu0 0.0
        %1005 = vmatpush1.msra.mxu0 %v344
        %1006 = vmatprep.subr.mxu0 0.0
        %1007 = vmatpush1.msra.mxu0 %v347
        %1008 = vmatprep.subr.mxu0 0.0
        %1009 = vmatpush1.msra.mxu0 %v350
        %1010 = vmatprep.subr.mxu0 0.0
        %1011 = vmatpush1.msra.mxu0 %v353
        %1012 = vmatprep.subr.mxu0 0.0
        %1013 = vmatpush1.msra.mxu0 %v356
        %1014 = vmatprep.subr.mxu0 0.0
        %1015 = vmatpush1.msra.mxu0 %v359
        %1016 = vmatprep.subr.mxu0 0.0
        %1017 = vmatpush1.msra.mxu0 %v362
        %1018 = vmatprep.subr.mxu0 0.0
        %1019 = vmatpush1.msra.mxu0 %v365
        %1020 = vmatprep.subr.mxu0 0.0
        %1021 = vmatpush1.msra.mxu0 0.0
        %1022 = vmatprep.subr.mxu0 0.0
        %1023 = vmatpush1.msra.mxu0 0.0
        %1024 = vmatprep.subr.mxu0 0.0
        %1025 = vmatpush1.msra.mxu0 0.0
        %1026 = vmatprep.subr.mxu0 0.0
        %1027 = vmatpush1.msra.mxu0 0.0
        %1028 = vmatprep.subr.mxu0 0.0
        %1029 = vmatpush1.msra.mxu0 0.0
        %1030 = vmatprep.subr.mxu0 0.0
        %1031 = vmatpush1.msra.mxu0 0.0
        %1032 = vmatprep.subr.mxu0 0.0
        %1033 = vmatpush1.msra.mxu0 0.0
        %1034 = vmatprep.subr.mxu0 0.0
        %1035 = vmatpush1.msra.mxu0 0.0
        %1036 = vmatprep.subr.mxu0 0.0
        %1037 = vmatpush1.msra.mxu0 0.0
        %1038 = vmatprep.subr.mxu0 0.0
        %1039 = vmatpush1.msra.mxu0 0.0
        %1040 = vmatprep.subr.mxu0 0.0
        %1041 = vmatpush1.msra.mxu0 0.0
        %1042 = vmatprep.subr.mxu0 0.0
        %1043 = vmatpush1.msra.mxu0 0.0
        %1044 = vmatprep.subr.mxu0 0.0
        %1045 = vmatpush1.msra.mxu0 0.0
        %1046 = vmatprep.subr.mxu0 0.0
        %1047 = vmatpush1.msra.mxu0 0.0
        %1048 = vmatprep.subr.mxu0 0.0
        %1049 = vmatpush1.msra.mxu0 0.0
        %1050 = vmatprep.subr.mxu0 0.0
        %1051 = vmatpush1.msra.mxu0 0.0
        %1052 = vmatprep.mubr.f32.mxu0 0.0
        %1053 = vmatmul.mubr.f32.gmra.mrb[0].mxu0 %v913
        %v1054 = vpop.f32.mrb[0].mxu0
        %v1055 = vadd.f32 %v404, %v1054
        %v1056 = vpop.f32.mrb[0].mxu0
        %1057 = vdwg.mxu0
        %v1058 = vadd.f32 %v915, %v984
        %v1059 = vxor.u32 %v1058, 2147483648
        %v1060 = vmul.f32 %v1059, 1.442695
        %v1061 = vpow.pop %v1060
        %v1062 = vadd.f32 %v1061, 1.0
        %v1063 = vrcp.pop %v1062
        %v1064 = vmul.f32 1.0, %v1063
        %v1066 = vrot.slane %v915, 4
        %v1068 = vadd.f32 %v1066, %v986
        %v1069 = vxor.u32 %v1068, 2147483648
        %v1070 = vmul.f32 %v1069, 1.442695
        %v1071 = vpow.pop %v1070
        %v1072 = vadd.f32 %v1071, 1.0
        %v1073 = vrcp.pop %v1072
        %v1074 = vmul.f32 1.0, %v1073
        %v1075 = vmul.f32 %v1064, %v1055
        %v1076 = vadd.f32 %v916, %v1075
        %v1077 = vtanh.pop %v1076
        %v1078 = vsub.f32 1.0, %v1074
        %v1079 = vmul.f32 %v1078, %v1077
        %v1080 = vmul.f32 %v1074, %v913
        %v1081 = vadd.f32 %v1079, %v1080
        %v1082 = vstv %s912
        %vm1083 = vcmp.lt.s32.totalorder %v1082, %v384
        %v1084 = vsel %vm1083, 1, 0
        %1085 = vset.pattern.permute.xlu0 0
        %1086 = vperm.xlu0 %1085, %v1084
        %v1087 = vpop.permute.xlu0 %1086
        %vm1088 = vcmp.eq.s32.totalorder %v1087, 1
        %v1089 = vsel %vm1088, %v1081, %v913
        %1090 = vst [vmem:[#allocation2] sm:$0xf] %v1089
        %v1091 = vsel %vm1088, %v1081, 0.0
        %1092 = vmatprep.subr.mxu0 0.0
        %1093 = vmatpush1.msra.mxu0 %v367
        %1094 = vmatprep.subr.mxu0 0.0
        %1095 = vmatpush1.msra.mxu0 %v368
        %1096 = vmatprep.subr.mxu0 0.0
        %1097 = vmatpush1.msra.mxu0 %v369
        %1098 = vmatprep.subr.mxu0 0.0
        %1099 = vmatpush1.msra.mxu0 %v370
        %1100 = vmatprep.subr.mxu0 0.0
        %1101 = vmatpush1.msra.mxu0 %v371
        %1102 = vmatprep.subr.mxu0 0.0
        %1103 = vmatpush1.msra.mxu0 %v372
        %1104 = vmatprep.subr.mxu0 0.0
        %1105 = vmatpush1.msra.mxu0 %v373
        %1106 = vmatprep.subr.mxu0 0.0
        %1107 = vmatpush1.msra.mxu0 %v374
        %1108 = vmatprep.subr.mxu0 0.0
        %1109 = vmatpush1.msra.mxu0 %v375
        %1110 = vmatprep.subr.mxu0 0.0
        %1111 = vmatpush1.msra.mxu0 %v376
        %1112 = vmatprep.subr.mxu0 0.0
        %1113 = vmatpush1.msra.mxu0 %v377
        %1114 = vmatprep.subr.mxu0 0.0
        %1115 = vmatpush1.msra.mxu0 %v378
        %1116 = vmatprep.subr.mxu0 0.0
        %1117 = vmatpush1.msra.mxu0 %v379
        %1118 = vmatprep.subr.mxu0 0.0
        %1119 = vmatpush1.msra.mxu0 %v380
        %1120 = vmatprep.subr.mxu0 0.0
        %1121 = vmatpush1.msra.mxu0 %v381
        %1122 = vmatprep.subr.mxu0 0.0
        %1123 = vmatpush1.msra.mxu0 %v382
        %1124 = vmatprep.subr.mxu0 0.0
        %1125 = vmatpush1.msra.mxu0 0.0
        %1126 = vmatprep.subr.mxu0 0.0
        %1127 = vmatpush1.msra.mxu0 0.0
        %1128 = vmatprep.subr.mxu0 0.0
        %1129 = vmatpush1.msra.mxu0 0.0
        %1130 = vmatprep.subr.mxu0 0.0
        %1131 = vmatpush1.msra.mxu0 0.0
        %1132 = vmatprep.subr.mxu0 0.0
        %1133 = vmatpush1.msra.mxu0 0.0
        %1134 = vmatprep.subr.mxu0 0.0
        %1135 = vmatpush1.msra.mxu0 0.0
        %1136 = vmatprep.subr.mxu0 0.0
        %1137 = vmatpush1.msra.mxu0 0.0
        %1138 = vmatprep.subr.mxu0 0.0
        %1139 = vmatpush1.msra.mxu0 0.0
        %1140 = vmatprep.subr.mxu0 0.0
        %1141 = vmatpush1.msra.mxu0 0.0
        %1142 = vmatprep.subr.mxu0 0.0
        %1143 = vmatpush1.msra.mxu0 0.0
        %1144 = vmatprep.subr.mxu0 0.0
        %1145 = vmatpush1.msra.mxu0 0.0
        %1146 = vmatprep.subr.mxu0 0.0
        %1147 = vmatpush1.msra.mxu0 0.0
        %1148 = vmatprep.subr.mxu0 0.0
        %1149 = vmatpush1.msra.mxu0 0.0
        %1150 = vmatprep.subr.mxu0 0.0
        %1151 = vmatpush1.msra.mxu0 0.0
        %1152 = vmatprep.subr.mxu0 0.0
        %1153 = vmatpush1.msra.mxu0 0.0
        %1154 = vmatprep.subr.mxu0 0.0
        %1155 = vmatpush1.msra.mxu0 0.0
        %1156 = vmatprep.mubr.f32.mxu0 0.0
        %1157 = vmatmul.mubr.f32.gmra.mrb[0].mxu0 %v1091
        %v1158 = vpop.f32.mrb[0].mxu0
        %v1159 = vadd.f32 %v587, %v1158
        %v1160 = vpop.f32.mrb[0].mxu0
        %1161 = vdwg.mxu0
        %s1162 = scalar_lea.vmem %s309, 8
        %1163 = vst [vmem:[%s1162] sm:$0xf] %v1159
        %s1164 = sadd.s32 %s316, 3
        %v1165 = vld [vmem:[#allocation2] sm:$0xf]
        %s1166 = scalar_lea.vmem %s300, 36
        %v1167 = vld [vmem:[%s1166] sm:$0xff]
        %v1168 = vld [vmem:[%s1166 + $0x8] sm:$0xf]
        %1169 = vmatprep.subr.mxu0 %v319
        %1170 = vmatpush1.msra.mxu0 %v318
        %1171 = vmatprep.subr.mxu0 %v322
        %1172 = vmatpush1.msra.mxu0 %v321
        %1173 = vmatprep.subr.mxu0 %v325
        %1174 = vmatpush1.msra.mxu0 %v324
        %1175 = vmatprep.subr.mxu0 %v328
        %1176 = vmatpush1.msra.mxu0 %v327
        %1177 = vmatprep.subr.mxu0 %v331
        %1178 = vmatpush1.msra.mxu0 %v330
        %1179 = vmatprep.subr.mxu0 %v334
        %1180 = vmatpush1.msra.mxu0 %v333
        %1181 = vmatprep.subr.mxu0 %v337
        %1182 = vmatpush1.msra.mxu0 %v336
        %1183 = vmatprep.subr.mxu0 %v340
        %1184 = vmatpush1.msra.mxu0 %v339
        %1185 = vmatprep.subr.mxu0 %v343
        %1186 = vmatpush1.msra.mxu0 %v342
        %1187 = vmatprep.subr.mxu0 %v346
        %1188 = vmatpush1.msra.mxu0 %v345
        %1189 = vmatprep.subr.mxu0 %v349
        %1190 = vmatpush1.msra.mxu0 %v348
        %1191 = vmatprep.subr.mxu0 %v352
        %1192 = vmatpush1.msra.mxu0 %v351
        %1193 = vmatprep.subr.mxu0 %v355
        %1194 = vmatpush1.msra.mxu0 %v354
        %1195 = vmatprep.subr.mxu0 %v358
        %1196 = vmatpush1.msra.mxu0 %v357
        %1197 = vmatprep.subr.mxu0 %v361
        %1198 = vmatpush1.msra.mxu0 %v360
        %1199 = vmatprep.subr.mxu0 %v364
        %1200 = vmatpush1.msra.mxu0 %v363
        %1201 = vmatprep.subr.mxu0 0.0
        %1202 = vmatpush1.msra.mxu0 0.0
        %1203 = vmatprep.subr.mxu0 0.0
        %1204 = vmatpush1.msra.mxu0 0.0
        %1205 = vmatprep.subr.mxu0 0.0
        %1206 = vmatpush1.msra.mxu0 0.0
        %1207 = vmatprep.subr.mxu0 0.0
        %1208 = vmatpush1.msra.mxu0 0.0
        %1209 = vmatprep.subr.mxu0 0.0
        %1210 = vmatpush1.msra.mxu0 0.0
        %1211 = vmatprep.subr.mxu0 0.0
        %1212 = vmatpush1.msra.mxu0 0.0
        %1213 = vmatprep.subr.mxu0 0.0
        %1214 = vmatpush1.msra.mxu0 0.0
        %1215 = vmatprep.subr.mxu0 0.0
        %1216 = vmatpush1.msra.mxu0 0.0
        %1217 = vmatprep.subr.mxu0 0.0
        %1218 = vmatpush1.msra.mxu0 0.0
        %1219 = vmatprep.subr.mxu0 0.0
        %1220 = vmatpush1.msra.mxu0 0.0
        %1221 = vmatprep.subr.mxu0 0.0
        %1222 = vmatpush1.msra.mxu0 0.0
        %1223 = vmatprep.subr.mxu0 0.0
        %1224 = vmatpush1.msra.mxu0 0.0
        %1225 = vmatprep.subr.mxu0 0.0
        %1226 = vmatpush1.msra.mxu0 0.0
        %1227 = vmatprep.subr.mxu0 0.0
        %1228 = vmatpush1.msra.mxu0 0.0
        %1229 = vmatprep.subr.mxu0 0.0
        %1230 = vmatpush1.msra.mxu0 0.0
        %1231 = vmatprep.subr.mxu0 0.0
        %1232 = vmatpush1.msra.mxu0 0.0
        %1233 = vmatprep.mubr.f32.mxu0 0.0
        %1234 = vmatmul.mubr.f32.gmra.mrb[0].mxu0 %v1165
        %v1235 = vpop.f32.mrb[0].mxu0
        %v1236 = vadd.f32 %v396, %v1235
        %v1237 = vpop.f32.mrb[0].mxu0
        %v1238 = vadd.f32 %v400, %v1237
        %1239 = vdwg.mxu0
        %1240 = vmatprep.subr.mxu0 0.0
        %1241 = vmatpush1.msra.mxu0 %v320
        %1242 = vmatprep.subr.mxu0 0.0
        %1243 = vmatpush1.msra.mxu0 %v323
        %1244 = vmatprep.subr.mxu0 0.0
        %1245 = vmatpush1.msra.mxu0 %v326
        %1246 = vmatprep.subr.mxu0 0.0
        %1247 = vmatpush1.msra.mxu0 %v329
        %1248 = vmatprep.subr.mxu0 0.0
        %1249 = vmatpush1.msra.mxu0 %v332
        %1250 = vmatprep.subr.mxu0 0.0
        %1251 = vmatpush1.msra.mxu0 %v335
        %1252 = vmatprep.subr.mxu0 0.0
        %1253 = vmatpush1.msra.mxu0 %v338
        %1254 = vmatprep.subr.mxu0 0.0
        %1255 = vmatpush1.msra.mxu0 %v341
        %1256 = vmatprep.subr.mxu0 0.0
        %1257 = vmatpush1.msra.mxu0 %v344
        %1258 = vmatprep.subr.mxu0 0.0
        %1259 = vmatpush1.msra.mxu0 %v347
        %1260 = vmatprep.subr.mxu0 0.0
        %1261 = vmatpush1.msra.mxu0 %v350
        %1262 = vmatprep.subr.mxu0 0.0
        %1263 = vmatpush1.msra.mxu0 %v353
        %1264 = vmatprep.subr.mxu0 0.0
        %1265 = vmatpush1.msra.mxu0 %v356
        %1266 = vmatprep.subr.mxu0 0.0
        %1267 = vmatpush1.msra.mxu0 %v359
        %1268 = vmatprep.subr.mxu0 0.0
        %1269 = vmatpush1.msra.mxu0 %v362
        %1270 = vmatprep.subr.mxu0 0.0
        %1271 = vmatpush1.msra.mxu0 %v365
        %1272 = vmatprep.subr.mxu0 0.0
        %1273 = vmatpush1.msra.mxu0 0.0
        %1274 = vmatprep.subr.mxu0 0.0
        %1275 = vmatpush1.msra.mxu0 0.0
        %1276 = vmatprep.subr.mxu0 0.0
        %1277 = vmatpush1.msra.mxu0 0.0
        %1278 = vmatprep.subr.mxu0 0.0
        %1279 = vmatpush1.msra.mxu0 0.0
        %1280 = vmatprep.subr.mxu0 0.0
        %1281 = vmatpush1.msra.mxu0 0.0
        %1282 = vmatprep.subr.mxu0 0.0
        %1283 = vmatpush1.msra.mxu0 0.0
        %1284 = vmatprep.subr.mxu0 0.0
        %1285 = vmatpush1.msra.mxu0 0.0
        %1286 = vmatprep.subr.mxu0 0.0
        %1287 = vmatpush1.msra.mxu0 0.0
        %1288 = vmatprep.subr.mxu0 0.0
        %1289 = vmatpush1.msra.mxu0 0.0
        %1290 = vmatprep.subr.mxu0 0.0
        %1291 = vmatpush1.msra.mxu0 0.0
        %1292 = vmatprep.subr.mxu0 0.0
        %1293 = vmatpush1.msra.mxu0 0.0
        %1294 = vmatprep.subr.mxu0 0.0
        %1295 = vmatpush1.msra.mxu0 0.0
        %1296 = vmatprep.subr.mxu0 0.0
        %1297 = vmatpush1.msra.mxu0 0.0
        %1298 = vmatprep.subr.mxu0 0.0
        %1299 = vmatpush1.msra.mxu0 0.0
        %1300 = vmatprep.subr.mxu0 0.0
        %1301 = vmatpush1.msra.mxu0 0.0
        %1302 = vmatprep.subr.mxu0 0.0
        %1303 = vmatpush1.msra.mxu0 0.0
        %1304 = vmatprep.mubr.f32.mxu0 0.0
        %1305 = vmatmul.mubr.f32.gmra.mrb[0].mxu0 %v1165
        %v1306 = vpop.f32.mrb[0].mxu0
        %v1307 = vadd.f32 %v404, %v1306
        %v1308 = vpop.f32.mrb[0].mxu0
        %1309 = vdwg.mxu0
        %v1310 = vadd.f32 %v1167, %v1236
        %v1311 = vxor.u32 %v1310, 2147483648
        %v1312 = vmul.f32 %v1311, 1.442695
        %v1313 = vpow.pop %v1312
        %v1314 = vadd.f32 %v1313, 1.0
        %v1315 = vrcp.pop %v1314
        %v1316 = vmul.f32 1.0, %v1315
        %v1318 = vrot.slane %v1167, 4
        %v1320 = vadd.f32 %v1318, %v1238
        %v1321 = vxor.u32 %v1320, 2147483648
        %v1322 = vmul.f32 %v1321, 1.442695
        %v1323 = vpow.pop %v1322
        %v1324 = vadd.f32 %v1323, 1.0
        %v1325 = vrcp.pop %v1324
        %v1326 = vmul.f32 1.0, %v1325
        %v1327 = vmul.f32 %v1316, %v1307
        %v1328 = vadd.f32 %v1168, %v1327
        %v1329 = vtanh.pop %v1328
        %v1330 = vsub.f32 1.0, %v1326
        %v1331 = vmul.f32 %v1330, %v1329
        %v1332 = vmul.f32 %v1326, %v1165
        %v1333 = vadd.f32 %v1331, %v1332
        %v1334 = vstv %s1164
        %vm1335 = vcmp.lt.s32.totalorder %v1334, %v384
        %v1336 = vsel %vm1335, 1, 0
        %1337 = vset.pattern.permute.xlu0 0
        %1338 = vperm.xlu0 %1337, %v1336
        %v1339 = vpop.permute.xlu0 %1338
        %vm1340 = vcmp.eq.s32.totalorder %v1339, 1
        %v1341 = vsel %vm1340, %v1333, %v1165
        %1342 = vst [vmem:[#allocation2] sm:$0xf] %v1341
        %v1343 = vsel %vm1340, %v1333, 0.0
        %1344 = vmatprep.subr.mxu0 0.0
        %1345 = vmatpush1.msra.mxu0 %v367
        %1346 = vmatprep.subr.mxu0 0.0
        %1347 = vmatpush1.msra.mxu0 %v368
        %1348 = vmatprep.subr.mxu0 0.0
        %1349 = vmatpush1.msra.mxu0 %v369
        %1350 = vmatprep.subr.mxu0 0.0
        %1351 = vmatpush1.msra.mxu0 %v370
        %1352 = vmatprep.subr.mxu0 0.0
        %1353 = vmatpush1.msra.mxu0 %v371
        %1354 = vmatprep.subr.mxu0 0.0
        %1355 = vmatpush1.msra.mxu0 %v372
        %1356 = vmatprep.subr.mxu0 0.0
        %1357 = vmatpush1.msra.mxu0 %v373
        %1358 = vmatprep.subr.mxu0 0.0
        %1359 = vmatpush1.msra.mxu0 %v374
        %1360 = vmatprep.subr.mxu0 0.0
        %1361 = vmatpush1.msra.mxu0 %v375
        %1362 = vmatprep.subr.mxu0 0.0
        %1363 = vmatpush1.msra.mxu0 %v376
        %1364 = vmatprep.subr.mxu0 0.0
        %1365 = vmatpush1.msra.mxu0 %v377
        %1366 = vmatprep.subr.mxu0 0.0
        %1367 = vmatpush1.msra.mxu0 %v378
        %1368 = vmatprep.subr.mxu0 0.0
        %1369 = vmatpush1.msra.mxu0 %v379
        %1370 = vmatprep.subr.mxu0 0.0
        %1371 = vmatpush1.msra.mxu0 %v380
        %1372 = vmatprep.subr.mxu0 0.0
        %1373 = vmatpush1.msra.mxu0 %v381
        %1374 = vmatprep.subr.mxu0 0.0
        %1375 = vmatpush1.msra.mxu0 %v382
        %1376 = vmatprep.subr.mxu0 0.0
        %1377 = vmatpush1.msra.mxu0 0.0
        %1378 = vmatprep.subr.mxu0 0.0
        %1379 = vmatpush1.msra.mxu0 0.0
        %1380 = vmatprep.subr.mxu0 0.0
        %1381 = vmatpush1.msra.mxu0 0.0
        %1382 = vmatprep.subr.mxu0 0.0
        %1383 = vmatpush1.msra.mxu0 0.0
        %1384 = vmatprep.subr.mxu0 0.0
        %1385 = vmatpush1.msra.mxu0 0.0
        %1386 = vmatprep.subr.mxu0 0.0
        %1387 = vmatpush1.msra.mxu0 0.0
        %1388 = vmatprep.subr.mxu0 0.0
        %1389 = vmatpush1.msra.mxu0 0.0
        %1390 = vmatprep.subr.mxu0 0.0
        %1391 = vmatpush1.msra.mxu0 0.0
        %1392 = vmatprep.subr.mxu0 0.0
        %1393 = vmatpush1.msra.mxu0 0.0
        %1394 = vmatprep.subr.mxu0 0.0
        %1395 = vmatpush1.msra.mxu0 0.0
        %1396 = vmatprep.subr.mxu0 0.0
        %1397 = vmatpush1.msra.mxu0 0.0
        %1398 = vmatprep.subr.mxu0 0.0
        %1399 = vmatpush1.msra.mxu0 0.0
        %1400 = vmatprep.subr.mxu0 0.0
        %1401 = vmatpush1.msra.mxu0 0.0
        %1402 = vmatprep.subr.mxu0 0.0
        %1403 = vmatpush1.msra.mxu0 0.0
        %1404 = vmatprep.subr.mxu0 0.0
        %1405 = vmatpush1.msra.mxu0 0.0
        %1406 = vmatprep.subr.mxu0 0.0
        %1407 = vmatpush1.msra.mxu0 0.0
        %1408 = vmatprep.mubr.f32.mxu0 0.0
        %1409 = vmatmul.mubr.f32.gmra.mrb[0].mxu0 %v1343
        %v1410 = vpop.f32.mrb[0].mxu0
        %v1411 = vadd.f32 %v587, %v1410
        %v1412 = vpop.f32.mrb[0].mxu0
        %1413 = vdwg.mxu0
        %s1414 = scalar_lea.vmem %s309, 12
        %1415 = vst [vmem:[%s1414] sm:$0xf] %v1411
      $region52: #{_encoder_impl.3} parent=43 // pred_fallthru
        _
      %p1416 = scmp.ge.s32.totalorder %s316, %s317
      // Predicated region
      $region53: #{_encoder_impl.3} parent=43 // pred_check
        %p1417 = pneg %p1416
      $region54: #{_encoder_impl.3} parent=43 // pred_check_branch
        %1419 = sbr.rel (%p1417) target = $region56
      $region55: #{_encoder_impl.3} parent=43 // pred_region
        %v1421 = vlaneseq
        %v1422 = vshrl.u32 %v1421, 7
        %v1423 = vsub.s32 0, %v1422
        %v1424 = vrot.slane %v383, %v1423
        %1426 = vst [vmem:[%s309] sm:$0xf] %v1424
        %1427 = vst [vmem:[%s309 + $0x4] sm:$0xf] %v1424
        %1428 = vst [vmem:[%s309 + $0x8] sm:$0xf] %v1424
        %1429 = vst [vmem:[%s309 + $0xc] sm:$0xf] %v1424
      $region56: #{_encoder_impl.3} parent=43 // pred_fallthru
        _
      %s1430 = smul.u32 4, %s24
      %p1431 = scmp.lt.s32.totalorder %s1430, 11
      %s1432 = scalar_select %p1431, %s1430, 11
      %p1433 = scmp.lt.s32.totalorder %s23, 0
      %s1434 = scalar_select %p1433, %s23, 0
      %s1435 = sadd.s32 %s1434, %s1432
      %s1436 = smul.addr %s1435, 4
      %s1437 = scalar_lea.vmem %s7, %s1436
      // Predicated region
      $region57: #{_encoder_impl.3} parent=43 // pred_check
        %p1438 = pneg %p189
      $region58: #{_encoder_impl.3} parent=43 // pred_check_branch
        %1440 = sbr.rel (%p1438) target = $region60
      $region59: #{_encoder_impl.3} parent=43 // pred_region
        %s1441 = smul.u32 4, %s24
      $region60: #{_encoder_impl.3} parent=43 // pred_fallthru
        _
    $region44: #{_encoder_impl.3} parent=5 // pred_fallthru
      _
    %p1442 = scmp.le.s32.totalorder 2, %s14
    // Predicated region
    $region61: #{_encoder_impl.3} parent=5 // pred_check
      %p1443 = pneg %p1442
    $region62: #{_encoder_impl.3} parent=5 // pred_check_branch
      %1445 = sbr.rel (%p1443) target = $region64
    $region63: #{_encoder_impl.3} parent=5 // pred_region
      %s1446 = ssub.s32 %s14, 2
      // Predicated region
      $region65: #{_encoder_impl.3} parent=63 // pred_check
        %p1447 = pneg %p195
      $region66: #{_encoder_impl.3} parent=63 // pred_check_branch
        %1449 = sbr.rel (%p1447) target = $region68
      $region67: #{_encoder_impl.3} parent=63 // pred_region
        %s1450 = smul.u32 4, %s26
        %p1451 = scmp.lt.s32.totalorder %s1450, 11
        %s1452 = scalar_select %p1451, %s1450, 11
        %p1453 = scmp.lt.s32.totalorder %s25, 0
        %s1454 = scalar_select %p1453, %s25, 0
        %s1455 = sadd.s32 %s1454, %s1452
        %s1456 = smul.addr %s1455, 4
        %s1457 = scalar_lea.vmem %s7, %s1456
      $region68: #{_encoder_impl.3} parent=63 // pred_fallthru
        _
    $region64: #{_encoder_impl.3} parent=5 // pred_fallthru
      _
  $region6: #{_encoder_impl.3} parent=0 // loop_footer
    %s18 = sadd.s32 1, %s14
  $region7: #{_encoder_impl.3} parent=0 // loop_footer_branch
    %13 = sbr.rel target = $region3
  $region8: #{_encoder_impl.3} parent=0 // loop_exit
    _

</llo_original>
